<compile_context>
chip_gen: v7x
topology: tpu7x:2x2x1
jax: 0.10.0
libtpu: 0.0.40
codegen_flags: <defaults>
</compile_context>

<pallas_src>
import functools

import jax
import jax.numpy as jnp
from jax.experimental import pallas as pl
from jax.experimental.pallas import tpu as pltpu


def _mm_contrastive_kernel(im_i_ref, s_j_ref, s_i_ref, im_j_ref,
                           cost_s_ref, cost_im_ref,
                           rowmax_s_ref, rowmax_im_ref, *,
                           margin, max_violation, tile_m, tile_n):
    i = pl.program_id(0)
    j = pl.program_id(1)
    nj = pl.num_programs(1)

    # ---- init resident scalar accumulators on the first grid step ----
    @pl.when((i == 0) & (j == 0))
    def _():
        cost_s_ref[...] = jnp.zeros_like(cost_s_ref)
        cost_im_ref[...] = jnp.zeros_like(cost_im_ref)

    if max_violation:
        # running hardest-negative per row of this row-block (j is the inner axis);
        # costs are >= 0, so 0 is a valid identity for the running max.
        @pl.when(j == 0)
        def _():
            rowmax_s_ref[...] = jnp.zeros_like(rowmax_s_ref)
            rowmax_im_ref[...] = jnp.zeros_like(rowmax_im_ref)

    im_i = im_i_ref[...]          # (TM, D)  image rows of block i
    s_j = s_j_ref[...]            # (TN, D)  sentence rows of block j
    s_i = s_i_ref[...]            # (TM, D)  sentence rows of block i
    im_j = im_j_ref[...]          # (TN, D)  image rows of block j

    # scores[r, c]   = <im_r, s_c>   (r in block i, c in block j)
    # scores_t[c, r] = <s_c, im_r>   (c in block i, r in block j) == scores[r, c]
    # (second matmul instead of a transposed diag/column reduction)
    scores = jax.lax.dot_general(
        im_i, s_j, (((1,), (1,)), ((), ())),
        preferred_element_type=jnp.float32)                       # (TM, TN)
    scores_t = jax.lax.dot_general(
        s_i, im_j, (((1,), (1,)), ((), ())),
        preferred_element_type=jnp.float32)                       # (TM, TN)

    # diagonal entries for this row-block: d1[r] = <im_r, s_r>, exact f32 on VPU
    d1 = jnp.sum(im_i.astype(jnp.float32) * s_i.astype(jnp.float32),
                 axis=1, keepdims=True)                           # (TM, 1)

    # global-index eye mask; only diagonal tiles (i == j) actually hit it
    r_idx = jax.lax.broadcasted_iota(jnp.int32, (tile_m, tile_n), 0) + i * tile_m
    c_idx = jax.lax.broadcasted_iota(jnp.int32, (tile_m, tile_n), 1) + j * tile_n
    off_diag = r_idx != c_idx

    cost_s = jnp.where(off_diag, jnp.maximum(margin + scores - d1, 0.0), 0.0)
    cost_im = jnp.where(off_diag, jnp.maximum(margin + scores_t - d1, 0.0), 0.0)

    if max_violation:
        rowmax_s_ref[...] = jnp.maximum(
            rowmax_s_ref[...], jnp.max(cost_s, axis=1, keepdims=True))
        rowmax_im_ref[...] = jnp.maximum(
            rowmax_im_ref[...], jnp.max(cost_im, axis=1, keepdims=True))

        @pl.when(j == nj - 1)
        def _():
            cost_s_ref[...] += jnp.sum(rowmax_s_ref[...], axis=0, keepdims=True)
            cost_im_ref[...] += jnp.sum(rowmax_im_ref[...], axis=0, keepdims=True)
    else:
        cost_s_ref[...] += jnp.sum(
            jnp.sum(cost_s, axis=1, keepdims=True), axis=0, keepdims=True)
        cost_im_ref[...] += jnp.sum(
            jnp.sum(cost_im, axis=1, keepdims=True), axis=0, keepdims=True)


def _pick_tile(n):
    for cand in (256, 128, 64, 32, 16, 8):
        if n % cand == 0:
            return cand
    return n   # single-tile fallback (block dims == full dims is always legal)


def mm_contrastive_loss(im, s, *, margin=0.0, max_violation=False,
                        tile_m=None, tile_n=None):
    """Pallas implementation of MMContrastiveLoss.forward (cosine_sim measure).

    im, s: (N, D) arrays (f32 or bf16). Returns (cost_s.sum(), cost_im.sum()) as f32.
    """
    assert im.ndim == 2 and s.ndim == 2 and im.shape == s.shape
    n, d = im.shape
    tm = tile_m if tile_m is not None else _pick_tile(n)
    tn = tile_n if tile_n is not None else _pick_tile(n)
    assert n % tm == 0 and n % tn == 0
    grid = (n // tm, n // tn)

    kernel = functools.partial(
        _mm_contrastive_kernel, margin=float(margin),
        max_violation=bool(max_violation), tile_m=tm, tile_n=tn)

    cost_s, cost_im = pl.pallas_call(
        kernel,
        out_shape=(jax.ShapeDtypeStruct((1, 1), jnp.float32),
                   jax.ShapeDtypeStruct((1, 1), jnp.float32)),
        grid_spec=pltpu.PrefetchScalarGridSpec(
            num_scalar_prefetch=0,
            grid=grid,
            in_specs=[
                pl.BlockSpec((tm, d), lambda i, j: (i, 0)),  # im, row block i
                pl.BlockSpec((tn, d), lambda i, j: (j, 0)),  # s,  col block j
                pl.BlockSpec((tm, d), lambda i, j: (i, 0)),  # s,  row block i (diag / scores_t lhs)
                pl.BlockSpec((tn, d), lambda i, j: (j, 0)),  # im, col block j (scores_t rhs)
            ],
            out_specs=(
                pl.BlockSpec((1, 1), lambda i, j: (0, 0)),   # resident accumulator
                pl.BlockSpec((1, 1), lambda i, j: (0, 0)),   # resident accumulator
            ),
            scratch_shapes=[
                pltpu.VMEM((tm, 1), jnp.float32),            # running row-max (cost_s)
                pltpu.VMEM((tm, 1), jnp.float32),            # running row-max (cost_im)
            ],
        ),
        compiler_params=pltpu.CompilerParams(
            dimension_semantics=("arbitrary", "arbitrary"),
            vmem_limit_bytes=64 * 1024 * 1024,
        ),
    )(im, s, s, im)

    return cost_s[0, 0], cost_im[0, 0]


def _reference(im, s, margin=0.0, max_violation=False):
    """Pure-JAX reference mirroring the PyTorch forward (cosine_sim measure)."""
    im = im.astype(jnp.float32)
    s = s.astype(jnp.float32)
    scores = im @ s.T
    diag = jnp.diagonal(scores).reshape(-1, 1)
    cost_s = jnp.maximum(margin + scores - diag, 0.0)
    cost_im = jnp.maximum(margin + scores - diag.T, 0.0)
    eye = jnp.eye(scores.shape[0], dtype=bool)
    cost_s = jnp.where(eye, 0.0, cost_s)
    cost_im = jnp.where(eye, 0.0, cost_im)
    if max_violation:
        cost_s = cost_s.max(axis=1)
        cost_im = cost_im.max(axis=0)
    return cost_s.sum(), cost_im.sum()


if __name__ == "__main__":
    key = jax.random.PRNGKey(0)
    k_im, k_s = jax.random.split(key)
    # N=512, D=128 with 256-wide tiles -> 2x2 grid, exercises the tiled/accumulator path.
    N, D = 512, 128
    im = jax.random.normal(k_im, (N, D), dtype=jnp.float32).astype(jnp.bfloat16)
    s = jax.random.normal(k_s, (N, D), dtype=jnp.float32).astype(jnp.bfloat16)

    for margin, max_violation in ((0.0, False), (0.2, False), (0.2, True)):
        cs, ci = mm_contrastive_loss(im, s, margin=margin,
                                     max_violation=max_violation)
        cs = jax.block_until_ready(cs)
        ci = jax.block_until_ready(ci)
        rs, ri = _reference(im, s, margin=margin, max_violation=max_violation)
        assert jnp.allclose(cs, rs, rtol=2e-3, atol=1e-2), \
            (margin, max_violation, float(cs), float(rs))
        assert jnp.allclose(ci, ri, rtol=2e-3, atol=1e-2), \
            (margin, max_violation, float(ci), float(ri))

    print("KERNEL_OK")
</pallas_src>

<mosaic_0001>
module attributes {stable_mosaic.version = 11 : i64} {
  func.func @_mm_contrastive_kernel(%arg0: i32, %arg1: i32, %arg2: memref<256x128xbf16, #tpu.memory_space<vmem>>, %arg3: memref<256x128xbf16, #tpu.memory_space<vmem>>, %arg4: memref<256x128xbf16, #tpu.memory_space<vmem>>, %arg5: memref<256x128xbf16, #tpu.memory_space<vmem>>, %arg6: memref<1x1xf32, #tpu.memory_space<vmem>>, %arg7: memref<1x1xf32, #tpu.memory_space<vmem>>, %arg8: memref<256x1xf32, #tpu.memory_space<vmem>>, %arg9: memref<256x1xf32, #tpu.memory_space<vmem>>) attributes {dimension_semantics = [#tpu.dimension_semantics<arbitrary>, #tpu.dimension_semantics<arbitrary>], iteration_bounds = array<i64: 2, 2>, scalar_prefetch = 0 : i64, scratch_operands = 2 : i64, tpu.core_type = #tpu.core_type<tc>, window_params = [{transform_indices = @transform_0, window_bounds = array<i64: 256, 128>}, {transform_indices = @transform_1, window_bounds = array<i64: 256, 128>}, {transform_indices = @transform_2, window_bounds = array<i64: 256, 128>}, {transform_indices = @transform_3, window_bounds = array<i64: 256, 128>}, {pipeline_mode = #tpu.pipeline_mode<synchronous>, transform_indices = @transform_4, window_bounds = array<i64: 1, 1>}, {pipeline_mode = #tpu.pipeline_mode<synchronous>, transform_indices = @transform_5, window_bounds = array<i64: 1, 1>}]} {
    %c0_i32 = arith.constant 0 : i32
    %0 = arith.cmpi eq, %arg0, %c0_i32 : i32
    %c0_i32_0 = arith.constant 0 : i32
    %1 = arith.cmpi eq, %arg1, %c0_i32_0 : i32
    %2 = arith.andi %0, %1 : i1
    %3 = arith.extui %2 : i1 to i32
    %c0_i32_1 = arith.constant 0 : i32
    %4 = arith.cmpi ne, %3, %c0_i32_1 : i32
    scf.if %4 {
      %cst_30 = arith.constant 0.000000e+00 : f32
      %55 = vector.broadcast %cst_30 : f32 to vector<1x1xf32>
      %c0_31 = arith.constant 0 : index
      %c0_32 = arith.constant 0 : index
      %56 = vector.load %arg6[%c0_31, %c0_32] : memref<1x1xf32, #tpu.memory_space<vmem>>, vector<1x1xf32>
      tpu.vector_store %arg6[%c0_31, %c0_32], %55 {strides = array<i32>} : memref<1x1xf32, #tpu.memory_space<vmem>>, vector<1x1xf32>,
      %cst_33 = arith.constant 0.000000e+00 : f32
      %57 = vector.broadcast %cst_33 : f32 to vector<1x1xf32>
      %c0_34 = arith.constant 0 : index
      %c0_35 = arith.constant 0 : index
      %58 = vector.load %arg7[%c0_34, %c0_35] : memref<1x1xf32, #tpu.memory_space<vmem>>, vector<1x1xf32>
      tpu.vector_store %arg7[%c0_34, %c0_35], %57 {strides = array<i32>} : memref<1x1xf32, #tpu.memory_space<vmem>>, vector<1x1xf32>,
    } else {
    }
    %c0 = arith.constant 0 : index
    %c0_2 = arith.constant 0 : index
    %5 = vector.load %arg2[%c0, %c0_2] : memref<256x128xbf16, #tpu.memory_space<vmem>>, vector<256x128xbf16>
    %c0_3 = arith.constant 0 : index
    %c0_4 = arith.constant 0 : index
    %6 = vector.load %arg3[%c0_3, %c0_4] : memref<256x128xbf16, #tpu.memory_space<vmem>>, vector<256x128xbf16>
    %c0_5 = arith.constant 0 : index
    %c0_6 = arith.constant 0 : index
    %7 = vector.load %arg4[%c0_5, %c0_6] : memref<256x128xbf16, #tpu.memory_space<vmem>>, vector<256x128xbf16>
    %c0_7 = arith.constant 0 : index
    %c0_8 = arith.constant 0 : index
    %8 = vector.load %arg5[%c0_7, %c0_8] : memref<256x128xbf16, #tpu.memory_space<vmem>>, vector<256x128xbf16>
    %cst = arith.constant dense<0.000000e+00> : vector<256x256xf32>
    %9 = tpu.matmul %5, %6, %cst {dimension_numbers = #tpu.dot_dimension_numbers<[1], [1], [0], [0], [0, 0, 1, 0], [], []>} : vector<256x128xbf16>, vector<256x128xbf16>, vector<256x256xf32> -> vector<256x256xf32>
    %cst_9 = arith.constant dense<0.000000e+00> : vector<256x256xf32>
    %10 = tpu.matmul %7, %8, %cst_9 {dimension_numbers = #tpu.dot_dimension_numbers<[1], [1], [0], [0], [0, 0, 1, 0], [], []>} : vector<256x128xbf16>, vector<256x128xbf16>, vector<256x256xf32> -> vector<256x256xf32>
    %11 = arith.extf %5 : vector<256x128xbf16> to vector<256x128xf32>
    %12 = arith.extf %7 : vector<256x128xbf16> to vector<256x128xf32>
    %13 = arith.mulf %11, %12 : vector<256x128xf32>
    %cst_10 = arith.constant dense<0.000000e+00> : vector<256xf32>
    %14 = vector.multi_reduction <add>, %13, %cst_10 [1] : vector<256x128xf32> to vector<256xf32>
    %15 = vector.shape_cast %14 : vector<256xf32> to vector<256x1xf32>
    %16 = tpu.iota {dimensions = array<i32: 0>} : vector<256x256xi32>
    %c256_i32 = arith.constant 256 : i32
    %17 = arith.muli %arg0, %c256_i32 : i32
    %18 = vector.broadcast %17 : i32 to vector<256x256xi32>
    %19 = arith.addi %16, %18 : vector<256x256xi32>
    %20 = tpu.iota {dimensions = array<i32: 1>} : vector<256x256xi32>
    %c256_i32_11 = arith.constant 256 : i32
    %21 = arith.muli %arg1, %c256_i32_11 : i32
    %22 = vector.broadcast %21 : i32 to vector<256x256xi32>
    %23 = arith.addi %20, %22 : vector<256x256xi32>
    %24 = arith.cmpi ne, %19, %23 : vector<256x256xi32>
    %cst_12 = arith.constant 0.000000e+00 : f32
    %25 = vector.broadcast %cst_12 : f32 to vector<256x256xf32>
    %26 = arith.addf %25, %9 : vector<256x256xf32>
    %27 = vector.broadcast %15 : vector<256x1xf32> to vector<256x256xf32>
    %28 = arith.subf %26, %27 : vector<256x256xf32>
    %cst_13 = arith.constant 0.000000e+00 : f32
    %29 = vector.broadcast %cst_13 : f32 to vector<256x256xf32>
    %30 = arith.maximumf %28, %29 : vector<256x256xf32>
    %cst_14 = arith.constant 0.000000e+00 : f32
    %31 = vector.broadcast %cst_14 : f32 to vector<256x256xf32>
    %32 = arith.select %24, %30, %31 : vector<256x256xi1>, vector<256x256xf32>
    %cst_15 = arith.constant 0.000000e+00 : f32
    %33 = vector.broadcast %cst_15 : f32 to vector<256x256xf32>
    %34 = arith.addf %33, %10 : vector<256x256xf32>
    %35 = vector.broadcast %15 : vector<256x1xf32> to vector<256x256xf32>
    %36 = arith.subf %34, %35 : vector<256x256xf32>
    %cst_16 = arith.constant 0.000000e+00 : f32
    %37 = vector.broadcast %cst_16 : f32 to vector<256x256xf32>
    %38 = arith.maximumf %36, %37 : vector<256x256xf32>
    %cst_17 = arith.constant 0.000000e+00 : f32
    %39 = vector.broadcast %cst_17 : f32 to vector<256x256xf32>
    %40 = arith.select %24, %38, %39 : vector<256x256xi1>, vector<256x256xf32>
    %c0_18 = arith.constant 0 : index
    %c0_19 = arith.constant 0 : index
    %41 = vector.load %arg6[%c0_18, %c0_19] : memref<1x1xf32, #tpu.memory_space<vmem>>, vector<1x1xf32>
    %cst_20 = arith.constant dense<0.000000e+00> : vector<256xf32>
    %42 = vector.multi_reduction <add>, %32, %cst_20 [1] : vector<256x256xf32> to vector<256xf32>
    %43 = vector.shape_cast %42 : vector<256xf32> to vector<256x1xf32>
    %cst_21 = arith.constant dense<0.000000e+00> : vector<1xf32>
    %44 = vector.multi_reduction <add>, %43, %cst_21 [0] : vector<256x1xf32> to vector<1xf32>
    %45 = vector.shape_cast %44 : vector<1xf32> to vector<1x1xf32>
    %46 = arith.addf %41, %45 : vector<1x1xf32>
    %c0_22 = arith.constant 0 : index
    %c0_23 = arith.constant 0 : index
    %47 = vector.load %arg6[%c0_22, %c0_23] : memref<1x1xf32, #tpu.memory_space<vmem>>, vector<1x1xf32>
    tpu.vector_store %arg6[%c0_22, %c0_23], %46 {strides = array<i32>} : memref<1x1xf32, #tpu.memory_space<vmem>>, vector<1x1xf32>,
    %c0_24 = arith.constant 0 : index
    %c0_25 = arith.constant 0 : index
    %48 = vector.load %arg7[%c0_24, %c0_25] : memref<1x1xf32, #tpu.memory_space<vmem>>, vector<1x1xf32>
    %cst_26 = arith.constant dense<0.000000e+00> : vector<256xf32>
    %49 = vector.multi_reduction <add>, %40, %cst_26 [1] : vector<256x256xf32> to vector<256xf32>
    %50 = vector.shape_cast %49 : vector<256xf32> to vector<256x1xf32>
    %cst_27 = arith.constant dense<0.000000e+00> : vector<1xf32>
    %51 = vector.multi_reduction <add>, %50, %cst_27 [0] : vector<256x1xf32> to vector<1xf32>
    %52 = vector.shape_cast %51 : vector<1xf32> to vector<1x1xf32>
    %53 = arith.addf %48, %52 : vector<1x1xf32>
    %c0_28 = arith.constant 0 : index
    %c0_29 = arith.constant 0 : index
    %54 = vector.load %arg7[%c0_28, %c0_29] : memref<1x1xf32, #tpu.memory_space<vmem>>, vector<1x1xf32>
    tpu.vector_store %arg7[%c0_28, %c0_29], %53 {strides = array<i32>} : memref<1x1xf32, #tpu.memory_space<vmem>>, vector<1x1xf32>,
    return
  }
  func.func @transform_0(%arg0: i32, %arg1: i32) -> (i32, i32) {
    %c0_i32 = arith.constant 0 : i32
    %c0_i32_0 = arith.constant 0 : i32
    return %arg0, %c0_i32 : i32, i32
  }
  func.func @transform_1(%arg0: i32, %arg1: i32) -> (i32, i32) {
    %c0_i32 = arith.constant 0 : i32
    %c0_i32_0 = arith.constant 0 : i32
    return %arg1, %c0_i32 : i32, i32
  }
  func.func @transform_2(%arg0: i32, %arg1: i32) -> (i32, i32) {
    %c0_i32 = arith.constant 0 : i32
    %c0_i32_0 = arith.constant 0 : i32
    return %arg0, %c0_i32 : i32, i32
  }
  func.func @transform_3(%arg0: i32, %arg1: i32) -> (i32, i32) {
    %c0_i32 = arith.constant 0 : i32
    %c0_i32_0 = arith.constant 0 : i32
    return %arg1, %c0_i32 : i32, i32
  }
  func.func @transform_4(%arg0: i32, %arg1: i32) -> (i32, i32) {
    %c0_i32 = arith.constant 0 : i32
    %c0_i32_0 = arith.constant 0 : i32
    %c0_i32_1 = arith.constant 0 : i32
    return %c0_i32, %c0_i32_0 : i32, i32
  }
  func.func @transform_5(%arg0: i32, %arg1: i32) -> (i32, i32) {
    %c0_i32 = arith.constant 0 : i32
    %c0_i32_0 = arith.constant 0 : i32
    %c0_i32_1 = arith.constant 0 : i32
    return %c0_i32, %c0_i32_0 : i32, i32
  }
}

</mosaic_0001>

<llo_original>
// kernel: tpu_custom_call.1
$region0: #{tpu_custom_call.1}
  #allocation0 [shape = 'u32[]', space=smem, size = 0x4, offset = 0x4, fixed_abs, tag = 'smem constant byte address 0x4 - core index']
  #allocation1 [shape = 'u32[144,128]{1,0:T(1,128)}', space=vmem, size = 0x12000, scoped, tag = 'internal scratch']
  #allocation2 [shape = 'f32[256,1]{1,0:T(8,128)}', space=vmem, size = 0x20000, scoped, tag = 'scratch operand']
  #allocation3 [shape = 'f32[256,1]{1,0:T(8,128)}', space=vmem, size = 0x20000, scoped, tag = 'scratch operand']
  %s0 = inlined_call_operand.hbm [shape: bf16[512,128], index: 0, kind: input, shape index: {}]
  %s1 = inlined_call_operand.hbm [shape: bf16[512,128], index: 1, kind: input, shape index: {}]
  %s2 = inlined_call_operand.hbm [shape: bf16[512,128], index: 2, kind: input, shape index: {}]
  %s3 = inlined_call_operand.hbm [shape: bf16[512,128], index: 3, kind: input, shape index: {}]
  %s4 = inlined_call_operand.hbm [shape: f32[1,1], index: 4, kind: output, shape index: {0}]
  %s5 = inlined_call_operand.hbm [shape: f32[1,1], index: 5, kind: output, shape index: {1}]
  %6 = xla_tuple %s4, %s5
  %s7 = sld [smem:[#allocation0]]
  $region77: #{tpu_custom_call.1} parent=0
    _
  %s9 = ssub.s32 1, %s7
  %s10 = scalar_select 0, %s9, %s7
  $region1: #{tpu_custom_call.1} parent=0
    #allocation4 [shape = 'u8[131072]{0}', space=vmem, size = 0x20000, scoped, tag = 'input window, operand 0']
    #allocation5 [shape = 's32[2]{0}', space=sflag, size = 0x8, scoped, tag = 'scoped memory for tpu_custom_call.1']
    #allocation6 [shape = 's32[2]{0}', space=sflag, size = 0x8, scoped, tag = 'scoped memory for tpu_custom_call.1']
    #allocation7 [shape = 'u8[131072]{0}', space=vmem, size = 0x20000, scoped, tag = 'input window, operand 1']
    #allocation8 [shape = 's32[2]{0}', space=sflag, size = 0x8, scoped, tag = 'scoped memory for tpu_custom_call.1']
    #allocation9 [shape = 'u8[131072]{0}', space=vmem, size = 0x20000, scoped, tag = 'input window, operand 2']
    #allocation10 [shape = 'u8[131072]{0}', space=vmem, size = 0x20000, scoped, tag = 'input window, operand 3']
    #allocation11 [shape = 's32[2]{0}', space=sflag, size = 0x8, scoped, tag = 'scoped memory for tpu_custom_call.1']
    #allocation12 [shape = 'u8[512]{0}', space=vmem, size = 0x400, scoped, tag = 'output window, operand 0, single buffered']
    #allocation13 [shape = 'u8[512]{0}', space=vmem, size = 0x400, scoped, tag = 'output window, operand 1, single buffered']
    #allocation14 [shape = 's32[1]{0}', space=sflag, size = 0x4, scoped, tag = 'scoped memory for tpu_custom_call.1']
    %11 = vsyncpa [#allocation5], 0
    %s12 = scalar_lea.sflag [#allocation5], 1
    %13 = vsyncpa %s12, 0
    %14 = vsyncpa [#allocation8], 0
    %s15 = scalar_lea.sflag [#allocation8], 1
    %16 = vsyncpa %s15, 0
    %17 = vsyncpa [#allocation11], 0
    %s18 = scalar_lea.sflag [#allocation11], 1
    %19 = vsyncpa %s18, 0
    %20 = vsyncpa [#allocation6], 0
    %21 = vsyncpa [#allocation14], 0
    loop: start=0, step=1, limit=6
    $region2: #{tpu_custom_call.1} parent=1 // loop_pre_header
      _
    $region3: #{tpu_custom_call.1} parent=1 // loop_header
      %s23 = sphi 0, %s27
      %p24 = scmp.ge.s32.totalorder %s23, 6
      %s30 = sphi 0, %s42
      %s31 = sphi 0, %s38
      %s32 = sphi 0, %s30
      %s33 = sphi 0, %s31
      %s34 = sphi 0, %s32
      %s35 = sphi 0, %s33
      %s45 = sphi 0, %s47
      %s48 = sphi 0, %s45
      %s49 = sphi 0, %s48
      %s65 = sphi 0, %s49
      %s71 = sphi 0, %s73
      %s74 = sphi 0, %s71
      %s75 = sphi 0, %s74
      %s91 = sphi 0, %s75
      %s97 = sphi 0, %s99
      %s100 = sphi 0, %s97
      %s101 = sphi 0, %s100
      %s117 = sphi 0, %s101
      %s123 = sphi 0, %s125
      %s126 = sphi 0, %s123
      %s127 = sphi 0, %s126
      %s143 = sphi 0, %s127
      %s147 = sphi 0, %s147
      %s149 = sphi 0, %s147
      %s150 = sphi 0, %s149
      %s164 = sphi 0, %s150
      %s168 = sphi 0, %s168
      %s170 = sphi 0, %s168
      %s171 = sphi 0, %s170
      %s185 = sphi 0, %s171
    $region4: #{tpu_custom_call.1} parent=1 // loop_header_branch
      %26 = sbr.rel (%p24) target = $region8
    $region5: #{tpu_custom_call.1} parent=1 // loop_body
      %s28 = ssub.s32 %s23, 1
      %s29 = ssub.s32 %s23, 2
      %s36 = sadd.s32 1, %s31
      %p37 = scmp.ge.s32.totalorder %s36, 2
      %s38 = scalar_select %p37, 0, %s36
      %s39 = sadd.s32 1, %s30
      %s40 = scalar_select %p37, %s39, %s30
      %p41 = scmp.ge.s32.totalorder %s40, 2
      %s42 = scalar_select %p41, 0, %s40
      %s43 = ssub.s32 %s30, %s42
      %p44 = scmp.eq.s32.totalorder %s43, 0
      %s46 = sadd.s32 %s45, 1
      %s47 = scalar_select %p44, %s45, %s46
      %p50 = pneg %p44
      %p51 = scmp.eq.s32.totalorder %s23, 3
      %p52 = por %p50, %p51
      %p53 = scmp.ne.s32.totalorder %s45, %s48
      %p54 = scmp.eq.s32.totalorder %s23, 0
      %p55 = por %p53, %p54
      %p56 = scmp.ne.s32.totalorder %s45, %s48
      %p57 = scmp.eq.s32.totalorder %s28, 3
      %p58 = por %p56, %p57
      %p59 = scmp.ne.s32.totalorder %s48, %s49
      %p60 = scmp.eq.s32.totalorder %s28, 0
      %p61 = por %p59, %p60
      %p62 = scmp.ne.s32.totalorder %s48, %s49
      %p63 = scmp.eq.s32.totalorder %s29, 3
      %p64 = por %p62, %p63
      %p66 = scmp.ne.s32.totalorder %s49, %s65
      %p67 = scmp.eq.s32.totalorder %s29, 0
      %p68 = por %p66, %p67
      %s69 = ssub.s32 %s31, %s38
      %p70 = scmp.eq.s32.totalorder %s69, 0
      %s72 = sadd.s32 %s71, 1
      %s73 = scalar_select %p70, %s71, %s72
      %p76 = pneg %p70
      %p77 = scmp.eq.s32.totalorder %s23, 3
      %p78 = por %p76, %p77
      %p79 = scmp.ne.s32.totalorder %s71, %s74
      %p80 = scmp.eq.s32.totalorder %s23, 0
      %p81 = por %p79, %p80
      %p82 = scmp.ne.s32.totalorder %s71, %s74
      %p83 = scmp.eq.s32.totalorder %s28, 3
      %p84 = por %p82, %p83
      %p85 = scmp.ne.s32.totalorder %s74, %s75
      %p86 = scmp.eq.s32.totalorder %s28, 0
      %p87 = por %p85, %p86
      %p88 = scmp.ne.s32.totalorder %s74, %s75
      %p89 = scmp.eq.s32.totalorder %s29, 3
      %p90 = por %p88, %p89
      %p92 = scmp.ne.s32.totalorder %s75, %s91
      %p93 = scmp.eq.s32.totalorder %s29, 0
      %p94 = por %p92, %p93
      %s95 = ssub.s32 %s30, %s42
      %p96 = scmp.eq.s32.totalorder %s95, 0
      %s98 = sadd.s32 %s97, 1
      %s99 = scalar_select %p96, %s97, %s98
      %p102 = pneg %p96
      %p103 = scmp.eq.s32.totalorder %s23, 3
      %p104 = por %p102, %p103
      %p105 = scmp.ne.s32.totalorder %s97, %s100
      %p106 = scmp.eq.s32.totalorder %s23, 0
      %p107 = por %p105, %p106
      %p108 = scmp.ne.s32.totalorder %s97, %s100
      %p109 = scmp.eq.s32.totalorder %s28, 3
      %p110 = por %p108, %p109
      %p111 = scmp.ne.s32.totalorder %s100, %s101
      %p112 = scmp.eq.s32.totalorder %s28, 0
      %p113 = por %p111, %p112
      %p114 = scmp.ne.s32.totalorder %s100, %s101
      %p115 = scmp.eq.s32.totalorder %s29, 3
      %p116 = por %p114, %p115
      %p118 = scmp.ne.s32.totalorder %s101, %s117
      %p119 = scmp.eq.s32.totalorder %s29, 0
      %p120 = por %p118, %p119
      %s121 = ssub.s32 %s31, %s38
      %p122 = scmp.eq.s32.totalorder %s121, 0
      %s124 = sadd.s32 %s123, 1
      %s125 = scalar_select %p122, %s123, %s124
      %p128 = pneg %p122
      %p129 = scmp.eq.s32.totalorder %s23, 3
      %p130 = por %p128, %p129
      %p131 = scmp.ne.s32.totalorder %s123, %s126
      %p132 = scmp.eq.s32.totalorder %s23, 0
      %p133 = por %p131, %p132
      %p134 = scmp.ne.s32.totalorder %s123, %s126
      %p135 = scmp.eq.s32.totalorder %s28, 3
      %p136 = por %p134, %p135
      %p137 = scmp.ne.s32.totalorder %s126, %s127
      %p138 = scmp.eq.s32.totalorder %s28, 0
      %p139 = por %p137, %p138
      %p140 = scmp.ne.s32.totalorder %s126, %s127
      %p141 = scmp.eq.s32.totalorder %s29, 3
      %p142 = por %p140, %p141
      %p144 = scmp.ne.s32.totalorder %s127, %s143
      %p145 = scmp.eq.s32.totalorder %s29, 0
      %p146 = por %p144, %p145
      %s148 = sadd.s32 %s147, 1
      %p151 = scmp.eq.s32.totalorder %s23, 3
      %p152 = scmp.ne.s32.totalorder %s147, %s149
      %p153 = scmp.eq.s32.totalorder %s23, 0
      %p154 = por %p152, %p153
      %p155 = scmp.ne.s32.totalorder %s147, %s149
      %p156 = scmp.eq.s32.totalorder %s28, 3
      %p157 = por %p155, %p156
      %p158 = scmp.ne.s32.totalorder %s149, %s150
      %p159 = scmp.eq.s32.totalorder %s28, 0
      %p160 = por %p158, %p159
      %p161 = scmp.ne.s32.totalorder %s149, %s150
      %p162 = scmp.eq.s32.totalorder %s29, 3
      %p163 = por %p161, %p162
      %p165 = scmp.ne.s32.totalorder %s150, %s164
      %p166 = scmp.eq.s32.totalorder %s29, 0
      %p167 = por %p165, %p166
      %s169 = sadd.s32 %s168, 1
      %p172 = scmp.eq.s32.totalorder %s23, 3
      %p173 = scmp.ne.s32.totalorder %s168, %s170
      %p174 = scmp.eq.s32.totalorder %s23, 0
      %p175 = por %p173, %p174
      %p176 = scmp.ne.s32.totalorder %s168, %s170
      %p177 = scmp.eq.s32.totalorder %s28, 3
      %p178 = por %p176, %p177
      %p179 = scmp.ne.s32.totalorder %s170, %s171
      %p180 = scmp.eq.s32.totalorder %s28, 0
      %p181 = por %p179, %p180
      %p182 = scmp.ne.s32.totalorder %s170, %s171
      %p183 = scmp.eq.s32.totalorder %s29, 3
      %p184 = por %p182, %p183
      %p186 = scmp.ne.s32.totalorder %s171, %s185
      %p187 = scmp.eq.s32.totalorder %s29, 0
      %p188 = por %p186, %p187
      %p189 = scmp.le.s32.totalorder 1, %s23
      %p190 = scmp.lt.s32.totalorder %s23, 5
      %p191 = pnand %p189, %p190
      %p192 = pneg %p191
      // Predicated region
      $region9: #{tpu_custom_call.1} parent=5 // pred_check
        _
      $region10: #{tpu_custom_call.1} parent=5 // pred_check_branch
        %194 = sbr.rel (%p191) target = $region12
      $region11: #{tpu_custom_call.1} parent=5 // pred_region
        %s195 = ssub.s32 %s23, 1
      $region12: #{tpu_custom_call.1} parent=5 // pred_fallthru
        _
      %p196 = scmp.lt.s32.totalorder %s23, 4
      // Predicated region
      $region13: #{tpu_custom_call.1} parent=5 // pred_check
        %p197 = pneg %p196
      $region14: #{tpu_custom_call.1} parent=5 // pred_check_branch
        %199 = sbr.rel (%p197) target = $region16
      $region15: #{tpu_custom_call.1} parent=5 // pred_region
        // Predicated region
        $region17: #{tpu_custom_call.1} parent=15 // pred_check
          %p200 = pneg %p55
        $region18: #{tpu_custom_call.1} parent=15 // pred_check_branch
          %202 = sbr.rel (%p200) target = $region20
        $region19: #{tpu_custom_call.1} parent=15 // pred_region
          %s203 = sand.u32 %s45, 1
          %s204 = scalar_lea.sflag [#allocation5], %s203
          %s205 = sand.u32 %s45, 1
          %s206 = smul.addr %s205, 128
          %s207 = scalar_lea.vmem [#allocation4], %s206
          %s208 = smul.u32 32, %s30
          %s210 = ssub.s32 2048, 2048
          %211 = vsyncadd %s204, %s210
          %s212 = smul.addr %s208, 64
          %s213 = scalar_lea.hbm %s0, %s212
          %s214 = sshll.u32 %s207, 4
          %s215 = int_to_ptr.vmem [resolvable:$true] %s214
          %220 = dma.hbm_to_vmem [thread:$0]  %s213, 2048, %s215, %s204, 64, 64, 4
        $region20: #{tpu_custom_call.1} parent=15 // pred_fallthru
          _
        // Predicated region
        $region21: #{tpu_custom_call.1} parent=15 // pred_check
          %p221 = pneg %p81
        $region22: #{tpu_custom_call.1} parent=15 // pred_check_branch
          %223 = sbr.rel (%p221) target = $region24
        $region23: #{tpu_custom_call.1} parent=15 // pred_region
          %s224 = sand.u32 %s23, 1
          %s225 = scalar_lea.sflag [#allocation8], %s224
          %s226 = sand.u32 %s71, 1
          %s227 = smul.addr %s226, 128
          %s228 = scalar_lea.vmem [#allocation7], %s227
          %s229 = smul.u32 32, %s31
          %s231 = ssub.s32 2048, 2048
          %232 = vsyncadd %s225, %s231
          %s233 = smul.addr %s229, 64
          %s234 = scalar_lea.hbm %s1, %s233
          %s235 = sshll.u32 %s228, 4
          %s236 = int_to_ptr.vmem [resolvable:$true] %s235
          %241 = dma.hbm_to_vmem [thread:$0]  %s234, 2048, %s236, %s225, 64, 64, 4
        $region24: #{tpu_custom_call.1} parent=15 // pred_fallthru
          _
        // Predicated region
        $region25: #{tpu_custom_call.1} parent=15 // pred_check
          %p242 = pneg %p107
        $region26: #{tpu_custom_call.1} parent=15 // pred_check_branch
          %244 = sbr.rel (%p242) target = $region28
        $region27: #{tpu_custom_call.1} parent=15 // pred_region
          %s245 = sand.u32 %s23, 1
          %s246 = scalar_lea.sflag [#allocation8], %s245
          %s247 = sand.u32 %s97, 1
          %s248 = smul.addr %s247, 128
          %s249 = scalar_lea.vmem [#allocation9], %s248
          %s250 = smul.u32 32, %s30
          %s252 = ssub.s32 2048, 2048
          %253 = vsyncadd %s246, %s252
          %s254 = smul.addr %s250, 64
          %s255 = scalar_lea.hbm %s2, %s254
          %s256 = sshll.u32 %s249, 4
          %s257 = int_to_ptr.vmem [resolvable:$true] %s256
          %262 = dma.hbm_to_vmem [thread:$0]  %s255, 2048, %s257, %s246, 64, 64, 4
        $region28: #{tpu_custom_call.1} parent=15 // pred_fallthru
          _
        // Predicated region
        $region29: #{tpu_custom_call.1} parent=15 // pred_check
          %p263 = pneg %p133
        $region30: #{tpu_custom_call.1} parent=15 // pred_check_branch
          %265 = sbr.rel (%p263) target = $region32
        $region31: #{tpu_custom_call.1} parent=15 // pred_region
          %s266 = sand.u32 %s123, 1
          %s267 = scalar_lea.sflag [#allocation11], %s266
          %s268 = sand.u32 %s123, 1
          %s269 = smul.addr %s268, 128
          %s270 = scalar_lea.vmem [#allocation10], %s269
          %s271 = smul.u32 32, %s31
          %s273 = ssub.s32 2048, 2048
          %274 = vsyncadd %s267, %s273
          %s275 = smul.addr %s271, 64
          %s276 = scalar_lea.hbm %s3, %s275
          %s277 = sshll.u32 %s270, 4
          %s278 = int_to_ptr.vmem [resolvable:$true] %s277
          %283 = dma.hbm_to_vmem [thread:$0]  %s276, 2048, %s278, %s267, 64, 64, 4
        $region32: #{tpu_custom_call.1} parent=15 // pred_fallthru
          _
      $region16: #{tpu_custom_call.1} parent=5 // pred_fallthru
        _
      %p284 = scmp.le.s32.totalorder 1, %s23
      %p285 = scmp.lt.s32.totalorder %s23, 5
      %p286 = pnand %p284, %p285
      %p287 = pneg %p286
      // Predicated region
      $region33: #{tpu_custom_call.1} parent=5 // pred_check
        _
      $region34: #{tpu_custom_call.1} parent=5 // pred_check_branch
        %289 = sbr.rel (%p286) target = $region36
      $region35: #{tpu_custom_call.1} parent=5 // pred_region
        %s290 = ssub.s32 %s23, 1
        %s291 = sand.u32 %s48, 1
        %s292 = scalar_lea.sflag [#allocation5], %s291
        %s293 = sand.u32 %s48, 1
        %s294 = smul.addr %s293, 128
        %s295 = scalar_lea.vmem [#allocation4], %s294
        // Predicated region
        $region37: #{tpu_custom_call.1} parent=35 // pred_check
          %p296 = pneg %p61
        $region38: #{tpu_custom_call.1} parent=35 // pred_check_branch
          %298 = sbr.rel (%p296) target = $region40
        $region39: #{tpu_custom_call.1} parent=35 // pred_region
          %299 = dma.done %s292, 2048
        $region40: #{tpu_custom_call.1} parent=35 // pred_fallthru
          _
        %s300 = sand.u32 %s28, 1
        %s301 = scalar_lea.sflag [#allocation8], %s300
        %s302 = sand.u32 %s74, 1
        %s303 = smul.addr %s302, 128
        %s304 = scalar_lea.vmem [#allocation7], %s303
        // Predicated region
        $region41: #{tpu_custom_call.1} parent=35 // pred_check
          %p305 = pneg %p87
        $region42: #{tpu_custom_call.1} parent=35 // pred_check_branch
          %307 = sbr.rel (%p305) target = $region44
        $region43: #{tpu_custom_call.1} parent=35 // pred_region
          %308 = dma.done %s301, 2048
        $region44: #{tpu_custom_call.1} parent=35 // pred_fallthru
          _
        %s309 = sand.u32 %s28, 1
        %s310 = scalar_lea.sflag [#allocation8], %s309
        %s311 = sand.u32 %s100, 1
        %s312 = smul.addr %s311, 128
        %s313 = scalar_lea.vmem [#allocation9], %s312
        // Predicated region
        $region45: #{tpu_custom_call.1} parent=35 // pred_check
          %p314 = pneg %p113
        $region46: #{tpu_custom_call.1} parent=35 // pred_check_branch
          %316 = sbr.rel (%p314) target = $region48
        $region47: #{tpu_custom_call.1} parent=35 // pred_region
          %317 = dma.done %s310, 2048
        $region48: #{tpu_custom_call.1} parent=35 // pred_fallthru
          _
        %s318 = sand.u32 %s126, 1
        %s319 = scalar_lea.sflag [#allocation11], %s318
        %s320 = sand.u32 %s126, 1
        %s321 = smul.addr %s320, 128
        %s322 = scalar_lea.vmem [#allocation10], %s321
        // Predicated region
        $region49: #{tpu_custom_call.1} parent=35 // pred_check
          %p323 = pneg %p139
        $region50: #{tpu_custom_call.1} parent=35 // pred_check_branch
          %325 = sbr.rel (%p323) target = $region52
        $region51: #{tpu_custom_call.1} parent=35 // pred_region
          %326 = dma.done %s319, 2048
        $region52: #{tpu_custom_call.1} parent=35 // pred_fallthru
          _
        %s327 = sand.u32 %s48, 1
        %s328 = scalar_lea.sflag [#allocation5], %s327
        %s329 = sand.u32 %s48, 1
        %s330 = smul.addr %s329, 128
        %s331 = scalar_lea.vmem [#allocation4], %s330
        %p332 = pneg %p61
        %p333 = pneg %p58
        %s334 = sand.u32 %s28, 1
        %s335 = scalar_lea.sflag [#allocation8], %s334
        %s336 = sand.u32 %s74, 1
        %s337 = smul.addr %s336, 128
        %s338 = scalar_lea.vmem [#allocation7], %s337
        %p339 = pneg %p87
        %p340 = pneg %p84
        %s341 = sand.u32 %s28, 1
        %s342 = scalar_lea.sflag [#allocation8], %s341
        %s343 = sand.u32 %s100, 1
        %s344 = smul.addr %s343, 128
        %s345 = scalar_lea.vmem [#allocation9], %s344
        %p346 = pneg %p113
        %p347 = pneg %p110
        %s348 = sand.u32 %s126, 1
        %s349 = scalar_lea.sflag [#allocation11], %s348
        %s350 = sand.u32 %s126, 1
        %s351 = smul.addr %s350, 128
        %s352 = scalar_lea.vmem [#allocation10], %s351
        %p353 = pneg %p139
        %p354 = pneg %p136
        %p355 = pneg %p160
        %p356 = pneg %p157
        %p357 = pneg %p181
        %p358 = pneg %p178
        %s359 = smul.u32 32, %s32
        %s360 = smul.u32 32, %s33
        %s361 = smul.u32 32, %s32
        %s362 = smul.u32 32, %s33
        %p364 = scmp.eq.s32.totalorder %s32, 0
        %p365 = scmp.eq.s32.totalorder %s33, 0
        %p366 = pnand %p364, %p365
        %p367 = pneg %p366
        // Predicated region
        $region53: #{tpu_custom_call.1} parent=35 // pred_check
          _
        $region54: #{tpu_custom_call.1} parent=35 // pred_check_branch
          %369 = sbr.rel (%p366) target = $region56
        $region55: #{tpu_custom_call.1} parent=35 // pred_region
          %vm370 = vcmask 0
          %371 = vst.msk [vmem:[#allocation12] sm:$0x1] %vm370, 0.0
          %372 = vst.msk [vmem:[#allocation13] sm:$0x1] %vm370, 0.0
        $region56: #{tpu_custom_call.1} parent=35 // pred_fallthru
          _
        %v373 = vld [vmem:[%s295] sm:$0xf]
        %v374 = vld [vmem:[%s295 + $0x4] sm:$0xf]
        %v375 = vld [vmem:[%s295 + $0x8] sm:$0xf]
        %v376 = vld [vmem:[%s295 + $0xc] sm:$0xf]
        %v377 = vld [vmem:[%s295 + $0x10] sm:$0xf]
        %v378 = vld [vmem:[%s295 + $0x14] sm:$0xf]
        %v379 = vld [vmem:[%s295 + $0x18] sm:$0xf]
        %v380 = vld [vmem:[%s295 + $0x1c] sm:$0xf]
        %v381 = vld [vmem:[%s295 + $0x20] sm:$0xf]
        %v382 = vld [vmem:[%s295 + $0x24] sm:$0xf]
        %v383 = vld [vmem:[%s295 + $0x28] sm:$0xf]
        %v384 = vld [vmem:[%s295 + $0x2c] sm:$0xf]
        %v385 = vld [vmem:[%s295 + $0x30] sm:$0xf]
        %v386 = vld [vmem:[%s295 + $0x34] sm:$0xf]
        %v387 = vld [vmem:[%s295 + $0x38] sm:$0xf]
        %v388 = vld [vmem:[%s295 + $0x3c] sm:$0xf]
        %v389 = vld [vmem:[%s295 + $0x40] sm:$0xf]
        %v390 = vld [vmem:[%s295 + $0x44] sm:$0xf]
        %v391 = vld [vmem:[%s295 + $0x48] sm:$0xf]
        %v392 = vld [vmem:[%s295 + $0x4c] sm:$0xf]
        %v393 = vld [vmem:[%s295 + $0x50] sm:$0xf]
        %v394 = vld [vmem:[%s295 + $0x54] sm:$0xf]
        %v395 = vld [vmem:[%s295 + $0x58] sm:$0xf]
        %v396 = vld [vmem:[%s295 + $0x5c] sm:$0xf]
        %v397 = vld [vmem:[%s295 + $0x60] sm:$0xf]
        %v398 = vld [vmem:[%s295 + $0x64] sm:$0xf]
        %v399 = vld [vmem:[%s295 + $0x68] sm:$0xf]
        %v400 = vld [vmem:[%s295 + $0x6c] sm:$0xf]
        %v401 = vld [vmem:[%s295 + $0x70] sm:$0xf]
        %v402 = vld [vmem:[%s295 + $0x74] sm:$0xf]
        %v403 = vld [vmem:[%s295 + $0x78] sm:$0xf]
        %v404 = vld [vmem:[%s295 + $0x7c] sm:$0xf]
        %v405 = vld [vmem:[%s304] sm:$0xf]
        %v406 = vld [vmem:[%s304 + $0x4] sm:$0xf]
        %v407 = vld [vmem:[%s304 + $0x8] sm:$0xf]
        %v408 = vld [vmem:[%s304 + $0xc] sm:$0xf]
        %v409 = vld [vmem:[%s304 + $0x10] sm:$0xf]
        %v410 = vld [vmem:[%s304 + $0x14] sm:$0xf]
        %v411 = vld [vmem:[%s304 + $0x18] sm:$0xf]
        %v412 = vld [vmem:[%s304 + $0x1c] sm:$0xf]
        %v413 = vld [vmem:[%s304 + $0x20] sm:$0xf]
        %v414 = vld [vmem:[%s304 + $0x24] sm:$0xf]
        %v415 = vld [vmem:[%s304 + $0x28] sm:$0xf]
        %v416 = vld [vmem:[%s304 + $0x2c] sm:$0xf]
        %v417 = vld [vmem:[%s304 + $0x30] sm:$0xf]
        %v418 = vld [vmem:[%s304 + $0x34] sm:$0xf]
        %v419 = vld [vmem:[%s304 + $0x38] sm:$0xf]
        %v420 = vld [vmem:[%s304 + $0x3c] sm:$0xf]
        %v421 = vld [vmem:[%s304 + $0x40] sm:$0xf]
        %v422 = vld [vmem:[%s304 + $0x44] sm:$0xf]
        %v423 = vld [vmem:[%s304 + $0x48] sm:$0xf]
        %v424 = vld [vmem:[%s304 + $0x4c] sm:$0xf]
        %v425 = vld [vmem:[%s304 + $0x50] sm:$0xf]
        %v426 = vld [vmem:[%s304 + $0x54] sm:$0xf]
        %v427 = vld [vmem:[%s304 + $0x58] sm:$0xf]
        %v428 = vld [vmem:[%s304 + $0x5c] sm:$0xf]
        %v429 = vld [vmem:[%s304 + $0x60] sm:$0xf]
        %v430 = vld [vmem:[%s304 + $0x64] sm:$0xf]
        %v431 = vld [vmem:[%s304 + $0x68] sm:$0xf]
        %v432 = vld [vmem:[%s304 + $0x6c] sm:$0xf]
        %v433 = vld [vmem:[%s304 + $0x70] sm:$0xf]
        %v434 = vld [vmem:[%s304 + $0x74] sm:$0xf]
        %v435 = vld [vmem:[%s304 + $0x78] sm:$0xf]
        %v436 = vld [vmem:[%s304 + $0x7c] sm:$0xf]
        %v437 = vld [vmem:[%s313] sm:$0xf]
        %v438 = vld [vmem:[%s313 + $0x4] sm:$0xf]
        %v439 = vld [vmem:[%s313 + $0x8] sm:$0xf]
        %v440 = vld [vmem:[%s313 + $0xc] sm:$0xf]
        %v441 = vld [vmem:[%s313 + $0x10] sm:$0xf]
        %v442 = vld [vmem:[%s313 + $0x14] sm:$0xf]
        %v443 = vld [vmem:[%s313 + $0x18] sm:$0xf]
        %v444 = vld [vmem:[%s313 + $0x1c] sm:$0xf]
        %v445 = vld [vmem:[%s313 + $0x20] sm:$0xf]
        %v446 = vld [vmem:[%s313 + $0x24] sm:$0xf]
        %v447 = vld [vmem:[%s313 + $0x28] sm:$0xf]
        %v448 = vld [vmem:[%s313 + $0x2c] sm:$0xf]
        %v449 = vld [vmem:[%s313 + $0x30] sm:$0xf]
        %v450 = vld [vmem:[%s313 + $0x34] sm:$0xf]
        %v451 = vld [vmem:[%s313 + $0x38] sm:$0xf]
        %v452 = vld [vmem:[%s313 + $0x3c] sm:$0xf]
        %v453 = vld [vmem:[%s313 + $0x40] sm:$0xf]
        %v454 = vld [vmem:[%s313 + $0x44] sm:$0xf]
        %v455 = vld [vmem:[%s313 + $0x48] sm:$0xf]
        %v456 = vld [vmem:[%s313 + $0x4c] sm:$0xf]
        %v457 = vld [vmem:[%s313 + $0x50] sm:$0xf]
        %v458 = vld [vmem:[%s313 + $0x54] sm:$0xf]
        %v459 = vld [vmem:[%s313 + $0x58] sm:$0xf]
        %v460 = vld [vmem:[%s313 + $0x5c] sm:$0xf]
        %v461 = vld [vmem:[%s313 + $0x60] sm:$0xf]
        %v462 = vld [vmem:[%s313 + $0x64] sm:$0xf]
        %v463 = vld [vmem:[%s313 + $0x68] sm:$0xf]
        %v464 = vld [vmem:[%s313 + $0x6c] sm:$0xf]
        %v465 = vld [vmem:[%s313 + $0x70] sm:$0xf]
        %v466 = vld [vmem:[%s313 + $0x74] sm:$0xf]
        %v467 = vld [vmem:[%s313 + $0x78] sm:$0xf]
        %v468 = vld [vmem:[%s313 + $0x7c] sm:$0xf]
        %v469 = vld [vmem:[%s322] sm:$0xf]
        %v470 = vld [vmem:[%s322 + $0x4] sm:$0xf]
        %v471 = vld [vmem:[%s322 + $0x8] sm:$0xf]
        %v472 = vld [vmem:[%s322 + $0xc] sm:$0xf]
        %v473 = vld [vmem:[%s322 + $0x10] sm:$0xf]
        %v474 = vld [vmem:[%s322 + $0x14] sm:$0xf]
        %v475 = vld [vmem:[%s322 + $0x18] sm:$0xf]
        %v476 = vld [vmem:[%s322 + $0x1c] sm:$0xf]
        %v477 = vld [vmem:[%s322 + $0x20] sm:$0xf]
        %v478 = vld [vmem:[%s322 + $0x24] sm:$0xf]
        %v479 = vld [vmem:[%s322 + $0x28] sm:$0xf]
        %v480 = vld [vmem:[%s322 + $0x2c] sm:$0xf]
        %v481 = vld [vmem:[%s322 + $0x30] sm:$0xf]
        %v482 = vld [vmem:[%s322 + $0x34] sm:$0xf]
        %v483 = vld [vmem:[%s322 + $0x38] sm:$0xf]
        %v484 = vld [vmem:[%s322 + $0x3c] sm:$0xf]
        %v485 = vld [vmem:[%s322 + $0x40] sm:$0xf]
        %v486 = vld [vmem:[%s322 + $0x44] sm:$0xf]
        %v487 = vld [vmem:[%s322 + $0x48] sm:$0xf]
        %v488 = vld [vmem:[%s322 + $0x4c] sm:$0xf]
        %v489 = vld [vmem:[%s322 + $0x50] sm:$0xf]
        %v490 = vld [vmem:[%s322 + $0x54] sm:$0xf]
        %v491 = vld [vmem:[%s322 + $0x58] sm:$0xf]
        %v492 = vld [vmem:[%s322 + $0x5c] sm:$0xf]
        %v493 = vld [vmem:[%s322 + $0x60] sm:$0xf]
        %v494 = vld [vmem:[%s322 + $0x64] sm:$0xf]
        %v495 = vld [vmem:[%s322 + $0x68] sm:$0xf]
        %v496 = vld [vmem:[%s322 + $0x6c] sm:$0xf]
        %v497 = vld [vmem:[%s322 + $0x70] sm:$0xf]
        %v498 = vld [vmem:[%s322 + $0x74] sm:$0xf]
        %v499 = vld [vmem:[%s322 + $0x78] sm:$0xf]
        %v500 = vld [vmem:[%s322 + $0x7c] sm:$0xf]
        %v501 = vunpack.c.l.bf16 %v373
        %v502 = vunpack.c.l.bf16 %v374
        %v503 = vunpack.c.l.bf16 %v375
        %v504 = vunpack.c.l.bf16 %v376
        %v505 = vunpack.c.l.bf16 %v377
        %v506 = vunpack.c.l.bf16 %v378
        %v507 = vunpack.c.l.bf16 %v379
        %v508 = vunpack.c.l.bf16 %v380
        %v509 = vunpack.c.l.bf16 %v381
        %v510 = vunpack.c.l.bf16 %v382
        %v511 = vunpack.c.l.bf16 %v383
        %v512 = vunpack.c.l.bf16 %v384
        %v513 = vunpack.c.l.bf16 %v385
        %v514 = vunpack.c.l.bf16 %v386
        %v515 = vunpack.c.l.bf16 %v387
        %v516 = vunpack.c.l.bf16 %v388
        %v517 = vunpack.c.l.bf16 %v389
        %v518 = vunpack.c.l.bf16 %v390
        %v519 = vunpack.c.l.bf16 %v391
        %v520 = vunpack.c.l.bf16 %v392
        %v521 = vunpack.c.l.bf16 %v393
        %v522 = vunpack.c.l.bf16 %v394
        %v523 = vunpack.c.l.bf16 %v395
        %v524 = vunpack.c.l.bf16 %v396
        %v525 = vunpack.c.l.bf16 %v397
        %v526 = vunpack.c.l.bf16 %v398
        %v527 = vunpack.c.l.bf16 %v399
        %v528 = vunpack.c.l.bf16 %v400
        %v529 = vunpack.c.l.bf16 %v401
        %v530 = vunpack.c.l.bf16 %v402
        %v531 = vunpack.c.l.bf16 %v403
        %v532 = vunpack.c.l.bf16 %v404
        %v533 = vunpack.c.l.bf16 %v437
        %v534 = vunpack.c.l.bf16 %v438
        %v535 = vunpack.c.l.bf16 %v439
        %v536 = vunpack.c.l.bf16 %v440
        %v537 = vunpack.c.l.bf16 %v441
        %v538 = vunpack.c.l.bf16 %v442
        %v539 = vunpack.c.l.bf16 %v443
        %v540 = vunpack.c.l.bf16 %v444
        %v541 = vunpack.c.l.bf16 %v445
        %v542 = vunpack.c.l.bf16 %v446
        %v543 = vunpack.c.l.bf16 %v447
        %v544 = vunpack.c.l.bf16 %v448
        %v545 = vunpack.c.l.bf16 %v449
        %v546 = vunpack.c.l.bf16 %v450
        %v547 = vunpack.c.l.bf16 %v451
        %v548 = vunpack.c.l.bf16 %v452
        %v549 = vunpack.c.l.bf16 %v453
        %v550 = vunpack.c.l.bf16 %v454
        %v551 = vunpack.c.l.bf16 %v455
        %v552 = vunpack.c.l.bf16 %v456
        %v553 = vunpack.c.l.bf16 %v457
        %v554 = vunpack.c.l.bf16 %v458
        %v555 = vunpack.c.l.bf16 %v459
        %v556 = vunpack.c.l.bf16 %v460
        %v557 = vunpack.c.l.bf16 %v461
        %v558 = vunpack.c.l.bf16 %v462
        %v559 = vunpack.c.l.bf16 %v463
        %v560 = vunpack.c.l.bf16 %v464
        %v561 = vunpack.c.l.bf16 %v465
        %v562 = vunpack.c.l.bf16 %v466
        %v563 = vunpack.c.l.bf16 %v467
        %v564 = vunpack.c.l.bf16 %v468
        %v565 = vmul.f32 %v501, %v533
        %v566 = vmul.f32 %v502, %v534
        %v567 = vmul.f32 %v503, %v535
        %v568 = vmul.f32 %v504, %v536
        %v569 = vmul.f32 %v505, %v537
        %v570 = vmul.f32 %v506, %v538
        %v571 = vmul.f32 %v507, %v539
        %v572 = vmul.f32 %v508, %v540
        %v573 = vmul.f32 %v509, %v541
        %v574 = vmul.f32 %v510, %v542
        %v575 = vmul.f32 %v511, %v543
        %v576 = vmul.f32 %v512, %v544
        %v577 = vmul.f32 %v513, %v545
        %v578 = vmul.f32 %v514, %v546
        %v579 = vmul.f32 %v515, %v547
        %v580 = vmul.f32 %v516, %v548
        %v581 = vmul.f32 %v517, %v549
        %v582 = vmul.f32 %v518, %v550
        %v583 = vmul.f32 %v519, %v551
        %v584 = vmul.f32 %v520, %v552
        %v585 = vmul.f32 %v521, %v553
        %v586 = vmul.f32 %v522, %v554
        %v587 = vmul.f32 %v523, %v555
        %v588 = vmul.f32 %v524, %v556
        %v589 = vmul.f32 %v525, %v557
        %v590 = vmul.f32 %v526, %v558
        %v591 = vmul.f32 %v527, %v559
        %v592 = vmul.f32 %v528, %v560
        %v593 = vmul.f32 %v529, %v561
        %v594 = vmul.f32 %v530, %v562
        %v595 = vmul.f32 %v531, %v563
        %v596 = vmul.f32 %v532, %v564
        %597 = vadd.xlane.f32.xlu0 %v565
        %v598 = vpop.xlane.xlu0 %597
        %599 = vadd.xlane.f32.xlu0 %v566
        %v600 = vpop.xlane.xlu0 %599
        %601 = vadd.xlane.f32.xlu0 %v567
        %v602 = vpop.xlane.xlu0 %601
        %603 = vadd.xlane.f32.xlu0 %v568
        %v604 = vpop.xlane.xlu0 %603
        %605 = vadd.xlane.f32.xlu0 %v569
        %v606 = vpop.xlane.xlu0 %605
        %607 = vadd.xlane.f32.xlu0 %v570
        %v608 = vpop.xlane.xlu0 %607
        %609 = vadd.xlane.f32.xlu0 %v571
        %v610 = vpop.xlane.xlu0 %609
        %611 = vadd.xlane.f32.xlu0 %v572
        %v612 = vpop.xlane.xlu0 %611
        %613 = vadd.xlane.f32.xlu0 %v573
        %v614 = vpop.xlane.xlu0 %613
        %615 = vadd.xlane.f32.xlu0 %v574
        %v616 = vpop.xlane.xlu0 %615
        %617 = vadd.xlane.f32.xlu0 %v575
        %v618 = vpop.xlane.xlu0 %617
        %619 = vadd.xlane.f32.xlu0 %v576
        %v620 = vpop.xlane.xlu0 %619
        %621 = vadd.xlane.f32.xlu0 %v577
        %v622 = vpop.xlane.xlu0 %621
        %623 = vadd.xlane.f32.xlu0 %v578
        %v624 = vpop.xlane.xlu0 %623
        %625 = vadd.xlane.f32.xlu0 %v579
        %v626 = vpop.xlane.xlu0 %625
        %627 = vadd.xlane.f32.xlu0 %v580
        %v628 = vpop.xlane.xlu0 %627
        %629 = vadd.xlane.f32.xlu0 %v581
        %v630 = vpop.xlane.xlu0 %629
        %631 = vadd.xlane.f32.xlu0 %v582
        %v632 = vpop.xlane.xlu0 %631
        %633 = vadd.xlane.f32.xlu0 %v583
        %v634 = vpop.xlane.xlu0 %633
        %635 = vadd.xlane.f32.xlu0 %v584
        %v636 = vpop.xlane.xlu0 %635
        %637 = vadd.xlane.f32.xlu0 %v585
        %v638 = vpop.xlane.xlu0 %637
        %639 = vadd.xlane.f32.xlu0 %v586
        %v640 = vpop.xlane.xlu0 %639
        %641 = vadd.xlane.f32.xlu0 %v587
        %v642 = vpop.xlane.xlu0 %641
        %643 = vadd.xlane.f32.xlu0 %v588
        %v644 = vpop.xlane.xlu0 %643
        %645 = vadd.xlane.f32.xlu0 %v589
        %v646 = vpop.xlane.xlu0 %645
        %647 = vadd.xlane.f32.xlu0 %v590
        %v648 = vpop.xlane.xlu0 %647
        %649 = vadd.xlane.f32.xlu0 %v591
        %v650 = vpop.xlane.xlu0 %649
        %651 = vadd.xlane.f32.xlu0 %v592
        %v652 = vpop.xlane.xlu0 %651
        %653 = vadd.xlane.f32.xlu0 %v593
        %v654 = vpop.xlane.xlu0 %653
        %655 = vadd.xlane.f32.xlu0 %v594
        %v656 = vpop.xlane.xlu0 %655
        %657 = vadd.xlane.f32.xlu0 %v595
        %v658 = vpop.xlane.xlu0 %657
        %659 = vadd.xlane.f32.xlu0 %v596
        %v660 = vpop.xlane.xlu0 %659
        %v661 = vlaneseq
        %v662 = vshrl.u32 %v661, 7
        %v663 = vadd.s32 %v662, 8
        %v664 = vadd.s32 %v662, 16
        %v665 = vadd.s32 %v662, 24
        %v666 = vadd.s32 %v662, 32
        %v667 = vadd.s32 %v662, 40
        %v668 = vadd.s32 %v662, 48
        %v669 = vadd.s32 %v662, 56
        %v670 = vadd.s32 %v662, 64
        %v671 = vadd.s32 %v662, 72
        %v672 = vadd.s32 %v662, 80
        %v673 = vadd.s32 %v662, 88
        %v674 = vadd.s32 %v662, 96
        %v675 = vadd.s32 %v662, 104
        %v676 = vadd.s32 %v662, 112
        %v677 = vadd.s32 %v662, 120
        %v678 = vadd.s32 %v662, 128
        %v679 = vadd.s32 %v662, 136
        %v680 = vadd.s32 %v662, 144
        %v681 = vadd.s32 %v662, 152
        %v682 = vadd.s32 %v662, 160
        %v683 = vadd.s32 %v662, 168
        %v684 = vadd.s32 %v662, 176
        %v685 = vadd.s32 %v662, 184
        %v686 = vadd.s32 %v662, 192
        %v687 = vadd.s32 %v662, 200
        %v688 = vadd.s32 %v662, 208
        %v689 = vadd.s32 %v662, 216
        %v690 = vadd.s32 %v662, 224
        %v691 = vadd.s32 %v662, 232
        %v692 = vadd.s32 %v662, 240
        %v693 = vadd.s32 %v662, 248
        %s694 = smul.u32 %s32, 256
        %v695 = vstv %s694
        %v696 = vadd.s32 %v662, %v695
        %v697 = vadd.s32 %v663, %v695
        %v698 = vadd.s32 %v664, %v695
        %v699 = vadd.s32 %v665, %v695
        %v700 = vadd.s32 %v666, %v695
        %v701 = vadd.s32 %v667, %v695
        %v702 = vadd.s32 %v668, %v695
        %v703 = vadd.s32 %v669, %v695
        %v704 = vadd.s32 %v670, %v695
        %v705 = vadd.s32 %v671, %v695
        %v706 = vadd.s32 %v672, %v695
        %v707 = vadd.s32 %v673, %v695
        %v708 = vadd.s32 %v674, %v695
        %v709 = vadd.s32 %v675, %v695
        %v710 = vadd.s32 %v676, %v695
        %v711 = vadd.s32 %v677, %v695
        %v712 = vadd.s32 %v678, %v695
        %v713 = vadd.s32 %v679, %v695
        %v714 = vadd.s32 %v680, %v695
        %v715 = vadd.s32 %v681, %v695
        %v716 = vadd.s32 %v682, %v695
        %v717 = vadd.s32 %v683, %v695
        %v718 = vadd.s32 %v684, %v695
        %v719 = vadd.s32 %v685, %v695
        %v720 = vadd.s32 %v686, %v695
        %v721 = vadd.s32 %v687, %v695
        %v722 = vadd.s32 %v688, %v695
        %v723 = vadd.s32 %v689, %v695
        %v724 = vadd.s32 %v690, %v695
        %v725 = vadd.s32 %v691, %v695
        %v726 = vadd.s32 %v692, %v695
        %v727 = vadd.s32 %v693, %v695
        %v728 = vlaneseq
        %v729 = vand.u32 %v728, 127
        %v730 = vadd.s32 %v729, 128
        %s731 = smul.u32 %s33, 256
        %v732 = vstv %s731
        %v733 = vadd.s32 %v729, %v732
        %v734 = vadd.s32 %v730, %v732
        %vm735 = vcmp.ne.s32.totalorder %v696, %v733
        %vm736 = vcmp.ne.s32.totalorder %v696, %v734
        %vm737 = vcmp.ne.s32.totalorder %v697, %v733
        %vm738 = vcmp.ne.s32.totalorder %v697, %v734
        %vm739 = vcmp.ne.s32.totalorder %v698, %v733
        %vm740 = vcmp.ne.s32.totalorder %v698, %v734
        %vm741 = vcmp.ne.s32.totalorder %v699, %v733
        %vm742 = vcmp.ne.s32.totalorder %v699, %v734
        %vm743 = vcmp.ne.s32.totalorder %v700, %v733
        %vm744 = vcmp.ne.s32.totalorder %v700, %v734
        %vm745 = vcmp.ne.s32.totalorder %v701, %v733
        %vm746 = vcmp.ne.s32.totalorder %v701, %v734
        %vm747 = vcmp.ne.s32.totalorder %v702, %v733
        %vm748 = vcmp.ne.s32.totalorder %v702, %v734
        %vm749 = vcmp.ne.s32.totalorder %v703, %v733
        %vm750 = vcmp.ne.s32.totalorder %v703, %v734
        %vm751 = vcmp.ne.s32.totalorder %v704, %v733
        %vm752 = vcmp.ne.s32.totalorder %v704, %v734
        %vm753 = vcmp.ne.s32.totalorder %v705, %v733
        %vm754 = vcmp.ne.s32.totalorder %v705, %v734
        %vm755 = vcmp.ne.s32.totalorder %v706, %v733
        %vm756 = vcmp.ne.s32.totalorder %v706, %v734
        %vm757 = vcmp.ne.s32.totalorder %v707, %v733
        %vm758 = vcmp.ne.s32.totalorder %v707, %v734
        %vm759 = vcmp.ne.s32.totalorder %v708, %v733
        %vm760 = vcmp.ne.s32.totalorder %v708, %v734
        %vm761 = vcmp.ne.s32.totalorder %v709, %v733
        %vm762 = vcmp.ne.s32.totalorder %v709, %v734
        %vm763 = vcmp.ne.s32.totalorder %v710, %v733
        %vm764 = vcmp.ne.s32.totalorder %v710, %v734
        %vm765 = vcmp.ne.s32.totalorder %v711, %v733
        %vm766 = vcmp.ne.s32.totalorder %v711, %v734
        %vm767 = vcmp.ne.s32.totalorder %v712, %v733
        %vm768 = vcmp.ne.s32.totalorder %v712, %v734
        %vm769 = vcmp.ne.s32.totalorder %v713, %v733
        %vm770 = vcmp.ne.s32.totalorder %v713, %v734
        %vm771 = vcmp.ne.s32.totalorder %v714, %v733
        %vm772 = vcmp.ne.s32.totalorder %v714, %v734
        %vm773 = vcmp.ne.s32.totalorder %v715, %v733
        %vm774 = vcmp.ne.s32.totalorder %v715, %v734
        %vm775 = vcmp.ne.s32.totalorder %v716, %v733
        %vm776 = vcmp.ne.s32.totalorder %v716, %v734
        %vm777 = vcmp.ne.s32.totalorder %v717, %v733
        %vm778 = vcmp.ne.s32.totalorder %v717, %v734
        %vm779 = vcmp.ne.s32.totalorder %v718, %v733
        %vm780 = vcmp.ne.s32.totalorder %v718, %v734
        %vm781 = vcmp.ne.s32.totalorder %v719, %v733
        %vm782 = vcmp.ne.s32.totalorder %v719, %v734
        %vm783 = vcmp.ne.s32.totalorder %v720, %v733
        %vm784 = vcmp.ne.s32.totalorder %v720, %v734
        %vm785 = vcmp.ne.s32.totalorder %v721, %v733
        %vm786 = vcmp.ne.s32.totalorder %v721, %v734
        %vm787 = vcmp.ne.s32.totalorder %v722, %v733
        %vm788 = vcmp.ne.s32.totalorder %v722, %v734
        %vm789 = vcmp.ne.s32.totalorder %v723, %v733
        %vm790 = vcmp.ne.s32.totalorder %v723, %v734
        %vm791 = vcmp.ne.s32.totalorder %v724, %v733
        %vm792 = vcmp.ne.s32.totalorder %v724, %v734
        %vm793 = vcmp.ne.s32.totalorder %v725, %v733
        %vm794 = vcmp.ne.s32.totalorder %v725, %v734
        %vm795 = vcmp.ne.s32.totalorder %v726, %v733
        %vm796 = vcmp.ne.s32.totalorder %v726, %v734
        %vm797 = vcmp.ne.s32.totalorder %v727, %v733
        %vm798 = vcmp.ne.s32.totalorder %v727, %v734
        %v831 = vunpack.c.l.b16 %v373
        %v832 = vunpack.c.l.b16 %v374
        %v833 = vunpack.c.l.b16 %v375
        %v834 = vunpack.c.l.b16 %v376
        %v835 = vunpack.c.l.b16 %v377
        %v836 = vunpack.c.l.b16 %v378
        %v837 = vunpack.c.l.b16 %v379
        %v838 = vunpack.c.l.b16 %v380
        %v839 = vunpack.c.l.b16 %v381
        %v840 = vunpack.c.l.b16 %v382
        %v841 = vunpack.c.l.b16 %v383
        %v842 = vunpack.c.l.b16 %v384
        %v843 = vunpack.c.l.b16 %v385
        %v844 = vunpack.c.l.b16 %v386
        %v845 = vunpack.c.l.b16 %v387
        %v846 = vunpack.c.l.b16 %v388
        %v847 = vunpack.c.l.b16 %v389
        %v848 = vunpack.c.l.b16 %v390
        %v849 = vunpack.c.l.b16 %v391
        %v850 = vunpack.c.l.b16 %v392
        %v851 = vunpack.c.l.b16 %v393
        %v852 = vunpack.c.l.b16 %v394
        %v853 = vunpack.c.l.b16 %v395
        %v854 = vunpack.c.l.b16 %v396
        %v855 = vunpack.c.l.b16 %v397
        %v856 = vunpack.c.l.b16 %v398
        %v857 = vunpack.c.l.b16 %v399
        %v858 = vunpack.c.l.b16 %v400
        %v859 = vunpack.c.l.b16 %v401
        %v860 = vunpack.c.l.b16 %v402
        %v861 = vunpack.c.l.b16 %v403
        %v862 = vunpack.c.l.b16 %v404
        %v863 = vpack.c.b16 %v832, %v831
        %v864 = vpack.c.b16 %v834, %v833
        %v865 = vpack.c.b16 %v836, %v835
        %v866 = vpack.c.b16 %v838, %v837
        %v867 = vpack.c.b16 %v840, %v839
        %v868 = vpack.c.b16 %v842, %v841
        %v869 = vpack.c.b16 %v844, %v843
        %v870 = vpack.c.b16 %v846, %v845
        %v871 = vpack.c.b16 %v848, %v847
        %v872 = vpack.c.b16 %v850, %v849
        %v873 = vpack.c.b16 %v852, %v851
        %v874 = vpack.c.b16 %v854, %v853
        %v875 = vpack.c.b16 %v856, %v855
        %v876 = vpack.c.b16 %v858, %v857
        %v877 = vpack.c.b16 %v860, %v859
        %v878 = vpack.c.b16 %v862, %v861
        %v927 = vunpack.c.l.b16 %v405
        %v928 = vunpack.c.l.b16 %v406
        %v929 = vunpack.c.l.b16 %v407
        %v930 = vunpack.c.l.b16 %v408
        %v931 = vunpack.c.l.b16 %v409
        %v932 = vunpack.c.l.b16 %v410
        %v933 = vunpack.c.l.b16 %v411
        %v934 = vunpack.c.l.b16 %v412
        %v935 = vunpack.c.l.b16 %v413
        %v936 = vunpack.c.l.b16 %v414
        %v937 = vunpack.c.l.b16 %v415
        %v938 = vunpack.c.l.b16 %v416
        %v939 = vunpack.c.l.b16 %v417
        %v940 = vunpack.c.l.b16 %v418
        %v941 = vunpack.c.l.b16 %v419
        %v942 = vunpack.c.l.b16 %v420
        %v943 = vunpack.c.l.b16 %v421
        %v944 = vunpack.c.l.b16 %v422
        %v945 = vunpack.c.l.b16 %v423
        %v946 = vunpack.c.l.b16 %v424
        %v947 = vunpack.c.l.b16 %v425
        %v948 = vunpack.c.l.b16 %v426
        %v949 = vunpack.c.l.b16 %v427
        %v950 = vunpack.c.l.b16 %v428
        %v951 = vunpack.c.l.b16 %v429
        %v952 = vunpack.c.l.b16 %v430
        %v953 = vunpack.c.l.b16 %v431
        %v954 = vunpack.c.l.b16 %v432
        %v955 = vunpack.c.l.b16 %v433
        %v956 = vunpack.c.l.b16 %v434
        %v957 = vunpack.c.l.b16 %v435
        %v958 = vunpack.c.l.b16 %v436
        %v959 = vpack.c.b16 %v928, %v927
        %v960 = vpack.c.b16 %v930, %v929
        %v961 = vpack.c.b16 %v932, %v931
        %v962 = vpack.c.b16 %v934, %v933
        %v963 = vpack.c.b16 %v936, %v935
        %v964 = vpack.c.b16 %v938, %v937
        %v965 = vpack.c.b16 %v940, %v939
        %v966 = vpack.c.b16 %v942, %v941
        %v967 = vpack.c.b16 %v944, %v943
        %v968 = vpack.c.b16 %v946, %v945
        %v969 = vpack.c.b16 %v948, %v947
        %v970 = vpack.c.b16 %v950, %v949
        %v971 = vpack.c.b16 %v952, %v951
        %v972 = vpack.c.b16 %v954, %v953
        %v973 = vpack.c.b16 %v956, %v955
        %v974 = vpack.c.b16 %v958, %v957
        %991 = vmatprep.subr.bf16.mxu0 0
        %992 = vmatpush1.bf16.xpose.msra.mxu0 %v959
        %993 = vmatprep.subr.bf16.mxu0 0
        %994 = vmatpush1.bf16.xpose.msra.mxu0 %v960
        %995 = vmatprep.subr.bf16.mxu0 0
        %996 = vmatpush1.bf16.xpose.msra.mxu0 %v961
        %997 = vmatprep.subr.bf16.mxu0 0
        %998 = vmatpush1.bf16.xpose.msra.mxu0 %v962
        %999 = vmatprep.subr.bf16.mxu0 0
        %1000 = vmatpush1.bf16.xpose.msra.mxu0 %v963
        %1001 = vmatprep.subr.bf16.mxu0 0
        %1002 = vmatpush1.bf16.xpose.msra.mxu0 %v964
        %1003 = vmatprep.subr.bf16.mxu0 0
        %1004 = vmatpush1.bf16.xpose.msra.mxu0 %v965
        %1005 = vmatprep.subr.bf16.mxu0 0
        %1006 = vmatpush1.bf16.xpose.msra.mxu0 %v966
        %1007 = vmatprep.subr.bf16.mxu0 0
        %1008 = vmatpush1.bf16.xpose.msra.mxu0 %v967
        %1009 = vmatprep.subr.bf16.mxu0 0
        %1010 = vmatpush1.bf16.xpose.msra.mxu0 %v968
        %1011 = vmatprep.subr.bf16.mxu0 0
        %1012 = vmatpush1.bf16.xpose.msra.mxu0 %v969
        %1013 = vmatprep.subr.bf16.mxu0 0
        %1014 = vmatpush1.bf16.xpose.msra.mxu0 %v970
        %1015 = vmatprep.subr.bf16.mxu0 0
        %1016 = vmatpush1.bf16.xpose.msra.mxu0 %v971
        %1017 = vmatprep.subr.bf16.mxu0 0
        %1018 = vmatpush1.bf16.xpose.msra.mxu0 %v972
        %1019 = vmatprep.subr.bf16.mxu0 0
        %1020 = vmatpush1.bf16.xpose.msra.mxu0 %v973
        %1021 = vmatprep.subr.bf16.mxu0 0
        %1022 = vmatpush1.bf16.xpose.msra.mxu0 %v974
        %1023 = vmatprep.mubr.bf16.mxu0 0
        %1024 = vmatmul.mubr.bf16.gmra.mrb[0].mxu0 %v863
        %v1025 = vpop.f32.mrb[0].mxu0
        %v1026 = vadd.f32 0.0, %v1025
        %v1027 = vpop.f32.mrb[0].mxu0
        %v1028 = vadd.f32 0.0, %v1027
        %v1029 = vpop.f32.mrb[0].mxu0
        %v1030 = vadd.f32 0.0, %v1029
        %v1031 = vpop.f32.mrb[0].mxu0
        %v1032 = vadd.f32 0.0, %v1031
        %1033 = vmatprep.mubr.bf16.mxu0 0
        %1034 = vmatmul.mubr.bf16.gmra.mrb[0].mxu0 %v864
        %v1035 = vpop.f32.mrb[0].mxu0
        %v1036 = vadd.f32 0.0, %v1035
        %v1037 = vpop.f32.mrb[0].mxu0
        %v1038 = vadd.f32 0.0, %v1037
        %v1039 = vpop.f32.mrb[0].mxu0
        %v1040 = vadd.f32 0.0, %v1039
        %v1041 = vpop.f32.mrb[0].mxu0
        %v1042 = vadd.f32 0.0, %v1041
        %1043 = vmatprep.mubr.bf16.mxu0 0
        %1044 = vmatmul.mubr.bf16.gmra.mrb[0].mxu0 %v865
        %v1045 = vpop.f32.mrb[0].mxu0
        %v1046 = vadd.f32 0.0, %v1045
        %v1047 = vpop.f32.mrb[0].mxu0
        %v1048 = vadd.f32 0.0, %v1047
        %v1049 = vpop.f32.mrb[0].mxu0
        %v1050 = vadd.f32 0.0, %v1049
        %v1051 = vpop.f32.mrb[0].mxu0
        %v1052 = vadd.f32 0.0, %v1051
        %1053 = vmatprep.mubr.bf16.mxu0 0
        %1054 = vmatmul.mubr.bf16.gmra.mrb[0].mxu0 %v866
        %v1055 = vpop.f32.mrb[0].mxu0
        %v1056 = vadd.f32 0.0, %v1055
        %v1057 = vpop.f32.mrb[0].mxu0
        %v1058 = vadd.f32 0.0, %v1057
        %v1059 = vpop.f32.mrb[0].mxu0
        %v1060 = vadd.f32 0.0, %v1059
        %v1061 = vpop.f32.mrb[0].mxu0
        %v1062 = vadd.f32 0.0, %v1061
        %1063 = vmatprep.mubr.bf16.mxu0 0
        %1064 = vmatmul.mubr.bf16.gmra.mrb[0].mxu0 %v867
        %v1065 = vpop.f32.mrb[0].mxu0
        %v1066 = vadd.f32 0.0, %v1065
        %v1067 = vpop.f32.mrb[0].mxu0
        %v1068 = vadd.f32 0.0, %v1067
        %v1069 = vpop.f32.mrb[0].mxu0
        %v1070 = vadd.f32 0.0, %v1069
        %v1071 = vpop.f32.mrb[0].mxu0
        %v1072 = vadd.f32 0.0, %v1071
        %1073 = vmatprep.mubr.bf16.mxu0 0
        %1074 = vmatmul.mubr.bf16.gmra.mrb[0].mxu0 %v868
        %v1075 = vpop.f32.mrb[0].mxu0
        %v1076 = vadd.f32 0.0, %v1075
        %v1077 = vpop.f32.mrb[0].mxu0
        %v1078 = vadd.f32 0.0, %v1077
        %v1079 = vpop.f32.mrb[0].mxu0
        %v1080 = vadd.f32 0.0, %v1079
        %v1081 = vpop.f32.mrb[0].mxu0
        %v1082 = vadd.f32 0.0, %v1081
        %1083 = vmatprep.mubr.bf16.mxu0 0
        %1084 = vmatmul.mubr.bf16.gmra.mrb[0].mxu0 %v869
        %v1085 = vpop.f32.mrb[0].mxu0
        %v1086 = vadd.f32 0.0, %v1085
        %v1087 = vpop.f32.mrb[0].mxu0
        %v1088 = vadd.f32 0.0, %v1087
        %v1089 = vpop.f32.mrb[0].mxu0
        %v1090 = vadd.f32 0.0, %v1089
        %v1091 = vpop.f32.mrb[0].mxu0
        %v1092 = vadd.f32 0.0, %v1091
        %1093 = vmatprep.mubr.bf16.mxu0 0
        %1094 = vmatmul.mubr.bf16.gmra.mrb[0].mxu0 %v870
        %v1095 = vpop.f32.mrb[0].mxu0
        %v1096 = vadd.f32 0.0, %v1095
        %v1097 = vpop.f32.mrb[0].mxu0
        %v1098 = vadd.f32 0.0, %v1097
        %v1099 = vpop.f32.mrb[0].mxu0
        %v1100 = vadd.f32 0.0, %v1099
        %v1101 = vpop.f32.mrb[0].mxu0
        %v1102 = vadd.f32 0.0, %v1101
        %1103 = vmatprep.mubr.bf16.mxu0 0
        %1104 = vmatmul.mubr.bf16.gmra.mrb[0].mxu0 %v871
        %v1105 = vpop.f32.mrb[0].mxu0
        %v1106 = vadd.f32 0.0, %v1105
        %v1107 = vpop.f32.mrb[0].mxu0
        %v1108 = vadd.f32 0.0, %v1107
        %v1109 = vpop.f32.mrb[0].mxu0
        %v1110 = vadd.f32 0.0, %v1109
        %v1111 = vpop.f32.mrb[0].mxu0
        %v1112 = vadd.f32 0.0, %v1111
        %1113 = vmatprep.mubr.bf16.mxu0 0
        %1114 = vmatmul.mubr.bf16.gmra.mrb[0].mxu0 %v872
        %v1115 = vpop.f32.mrb[0].mxu0
        %v1116 = vadd.f32 0.0, %v1115
        %v1117 = vpop.f32.mrb[0].mxu0
        %v1118 = vadd.f32 0.0, %v1117
        %v1119 = vpop.f32.mrb[0].mxu0
        %v1120 = vadd.f32 0.0, %v1119
        %v1121 = vpop.f32.mrb[0].mxu0
        %v1122 = vadd.f32 0.0, %v1121
        %1123 = vmatprep.mubr.bf16.mxu0 0
        %1124 = vmatmul.mubr.bf16.gmra.mrb[0].mxu0 %v873
        %v1125 = vpop.f32.mrb[0].mxu0
        %v1126 = vadd.f32 0.0, %v1125
        %v1127 = vpop.f32.mrb[0].mxu0
        %v1128 = vadd.f32 0.0, %v1127
        %v1129 = vpop.f32.mrb[0].mxu0
        %v1130 = vadd.f32 0.0, %v1129
        %v1131 = vpop.f32.mrb[0].mxu0
        %v1132 = vadd.f32 0.0, %v1131
        %1133 = vmatprep.mubr.bf16.mxu0 0
        %1134 = vmatmul.mubr.bf16.gmra.mrb[0].mxu0 %v874
        %v1135 = vpop.f32.mrb[0].mxu0
        %v1136 = vadd.f32 0.0, %v1135
        %v1137 = vpop.f32.mrb[0].mxu0
        %v1138 = vadd.f32 0.0, %v1137
        %v1139 = vpop.f32.mrb[0].mxu0
        %v1140 = vadd.f32 0.0, %v1139
        %v1141 = vpop.f32.mrb[0].mxu0
        %v1142 = vadd.f32 0.0, %v1141
        %1143 = vmatprep.mubr.bf16.mxu0 0
        %1144 = vmatmul.mubr.bf16.gmra.mrb[0].mxu0 %v875
        %v1145 = vpop.f32.mrb[0].mxu0
        %v1146 = vadd.f32 0.0, %v1145
        %v1147 = vpop.f32.mrb[0].mxu0
        %v1148 = vadd.f32 0.0, %v1147
        %v1149 = vpop.f32.mrb[0].mxu0
        %v1150 = vadd.f32 0.0, %v1149
        %v1151 = vpop.f32.mrb[0].mxu0
        %v1152 = vadd.f32 0.0, %v1151
        %1153 = vmatprep.mubr.bf16.mxu0 0
        %1154 = vmatmul.mubr.bf16.gmra.mrb[0].mxu0 %v876
        %v1155 = vpop.f32.mrb[0].mxu0
        %v1156 = vadd.f32 0.0, %v1155
        %v1157 = vpop.f32.mrb[0].mxu0
        %v1158 = vadd.f32 0.0, %v1157
        %v1159 = vpop.f32.mrb[0].mxu0
        %v1160 = vadd.f32 0.0, %v1159
        %v1161 = vpop.f32.mrb[0].mxu0
        %v1162 = vadd.f32 0.0, %v1161
        %1163 = vmatprep.mubr.bf16.mxu0 0
        %1164 = vmatmul.mubr.bf16.gmra.mrb[0].mxu0 %v877
        %v1165 = vpop.f32.mrb[0].mxu0
        %v1166 = vadd.f32 0.0, %v1165
        %v1167 = vpop.f32.mrb[0].mxu0
        %v1168 = vadd.f32 0.0, %v1167
        %v1169 = vpop.f32.mrb[0].mxu0
        %v1170 = vadd.f32 0.0, %v1169
        %v1171 = vpop.f32.mrb[0].mxu0
        %v1172 = vadd.f32 0.0, %v1171
        %1173 = vmatprep.mubr.bf16.mxu0 0
        %1174 = vmatmul.mubr.bf16.gmra.mrb[0].mxu0 %v878
        %v1175 = vpop.f32.mrb[0].mxu0
        %v1176 = vadd.f32 0.0, %v1175
        %v1177 = vpop.f32.mrb[0].mxu0
        %v1178 = vadd.f32 0.0, %v1177
        %v1179 = vpop.f32.mrb[0].mxu0
        %v1180 = vadd.f32 0.0, %v1179
        %v1181 = vpop.f32.mrb[0].mxu0
        %v1182 = vadd.f32 0.0, %v1181
        %1183 = vdwg.mxu0
        %v1184 = vsub.f32 %v1026, %v598
        %v1185 = vsub.f32 %v1028, %v598
        %v1186 = vsub.f32 %v1030, %v600
        %v1187 = vsub.f32 %v1032, %v600
        %v1188 = vsub.f32 %v1036, %v602
        %v1189 = vsub.f32 %v1038, %v602
        %v1190 = vsub.f32 %v1040, %v604
        %v1191 = vsub.f32 %v1042, %v604
        %v1192 = vsub.f32 %v1046, %v606
        %v1193 = vsub.f32 %v1048, %v606
        %v1194 = vsub.f32 %v1050, %v608
        %v1195 = vsub.f32 %v1052, %v608
        %v1196 = vsub.f32 %v1056, %v610
        %v1197 = vsub.f32 %v1058, %v610
        %v1198 = vsub.f32 %v1060, %v612
        %v1199 = vsub.f32 %v1062, %v612
        %v1200 = vsub.f32 %v1066, %v614
        %v1201 = vsub.f32 %v1068, %v614
        %v1202 = vsub.f32 %v1070, %v616
        %v1203 = vsub.f32 %v1072, %v616
        %v1204 = vsub.f32 %v1076, %v618
        %v1205 = vsub.f32 %v1078, %v618
        %v1206 = vsub.f32 %v1080, %v620
        %v1207 = vsub.f32 %v1082, %v620
        %v1208 = vsub.f32 %v1086, %v622
        %v1209 = vsub.f32 %v1088, %v622
        %v1210 = vsub.f32 %v1090, %v624
        %v1211 = vsub.f32 %v1092, %v624
        %v1212 = vsub.f32 %v1096, %v626
        %v1213 = vsub.f32 %v1098, %v626
        %v1214 = vsub.f32 %v1100, %v628
        %v1215 = vsub.f32 %v1102, %v628
        %v1216 = vsub.f32 %v1106, %v630
        %v1217 = vsub.f32 %v1108, %v630
        %v1218 = vsub.f32 %v1110, %v632
        %v1219 = vsub.f32 %v1112, %v632
        %v1220 = vsub.f32 %v1116, %v634
        %v1221 = vsub.f32 %v1118, %v634
        %v1222 = vsub.f32 %v1120, %v636
        %v1223 = vsub.f32 %v1122, %v636
        %v1224 = vsub.f32 %v1126, %v638
        %v1225 = vsub.f32 %v1128, %v638
        %v1226 = vsub.f32 %v1130, %v640
        %v1227 = vsub.f32 %v1132, %v640
        %v1228 = vsub.f32 %v1136, %v642
        %v1229 = vsub.f32 %v1138, %v642
        %v1230 = vsub.f32 %v1140, %v644
        %v1231 = vsub.f32 %v1142, %v644
        %v1232 = vsub.f32 %v1146, %v646
        %v1233 = vsub.f32 %v1148, %v646
        %v1234 = vsub.f32 %v1150, %v648
        %v1235 = vsub.f32 %v1152, %v648
        %v1236 = vsub.f32 %v1156, %v650
        %v1237 = vsub.f32 %v1158, %v650
        %v1238 = vsub.f32 %v1160, %v652
        %v1239 = vsub.f32 %v1162, %v652
        %v1240 = vsub.f32 %v1166, %v654
        %v1241 = vsub.f32 %v1168, %v654
        %v1242 = vsub.f32 %v1170, %v656
        %v1243 = vsub.f32 %v1172, %v656
        %v1244 = vsub.f32 %v1176, %v658
        %v1245 = vsub.f32 %v1178, %v658
        %v1246 = vsub.f32 %v1180, %v660
        %v1247 = vsub.f32 %v1182, %v660
        %v1248 = vmax.f32 %v1184, 0.0
        %v1249 = vmax.f32 %v1185, 0.0
        %v1250 = vmax.f32 %v1186, 0.0
        %v1251 = vmax.f32 %v1187, 0.0
        %v1252 = vmax.f32 %v1188, 0.0
        %v1253 = vmax.f32 %v1189, 0.0
        %v1254 = vmax.f32 %v1190, 0.0
        %v1255 = vmax.f32 %v1191, 0.0
        %v1256 = vmax.f32 %v1192, 0.0
        %v1257 = vmax.f32 %v1193, 0.0
        %v1258 = vmax.f32 %v1194, 0.0
        %v1259 = vmax.f32 %v1195, 0.0
        %v1260 = vmax.f32 %v1196, 0.0
        %v1261 = vmax.f32 %v1197, 0.0
        %v1262 = vmax.f32 %v1198, 0.0
        %v1263 = vmax.f32 %v1199, 0.0
        %v1264 = vmax.f32 %v1200, 0.0
        %v1265 = vmax.f32 %v1201, 0.0
        %v1266 = vmax.f32 %v1202, 0.0
        %v1267 = vmax.f32 %v1203, 0.0
        %v1268 = vmax.f32 %v1204, 0.0
        %v1269 = vmax.f32 %v1205, 0.0
        %v1270 = vmax.f32 %v1206, 0.0
        %v1271 = vmax.f32 %v1207, 0.0
        %v1272 = vmax.f32 %v1208, 0.0
        %v1273 = vmax.f32 %v1209, 0.0
        %v1274 = vmax.f32 %v1210, 0.0
        %v1275 = vmax.f32 %v1211, 0.0
        %v1276 = vmax.f32 %v1212, 0.0
        %v1277 = vmax.f32 %v1213, 0.0
        %v1278 = vmax.f32 %v1214, 0.0
        %v1279 = vmax.f32 %v1215, 0.0
        %v1280 = vmax.f32 %v1216, 0.0
        %v1281 = vmax.f32 %v1217, 0.0
        %v1282 = vmax.f32 %v1218, 0.0
        %v1283 = vmax.f32 %v1219, 0.0
        %v1284 = vmax.f32 %v1220, 0.0
        %v1285 = vmax.f32 %v1221, 0.0
        %v1286 = vmax.f32 %v1222, 0.0
        %v1287 = vmax.f32 %v1223, 0.0
        %v1288 = vmax.f32 %v1224, 0.0
        %v1289 = vmax.f32 %v1225, 0.0
        %v1290 = vmax.f32 %v1226, 0.0
        %v1291 = vmax.f32 %v1227, 0.0
        %v1292 = vmax.f32 %v1228, 0.0
        %v1293 = vmax.f32 %v1229, 0.0
        %v1294 = vmax.f32 %v1230, 0.0
        %v1295 = vmax.f32 %v1231, 0.0
        %v1296 = vmax.f32 %v1232, 0.0
        %v1297 = vmax.f32 %v1233, 0.0
        %v1298 = vmax.f32 %v1234, 0.0
        %v1299 = vmax.f32 %v1235, 0.0
        %v1300 = vmax.f32 %v1236, 0.0
        %v1301 = vmax.f32 %v1237, 0.0
        %v1302 = vmax.f32 %v1238, 0.0
        %v1303 = vmax.f32 %v1239, 0.0
        %v1304 = vmax.f32 %v1240, 0.0
        %v1305 = vmax.f32 %v1241, 0.0
        %v1306 = vmax.f32 %v1242, 0.0
        %v1307 = vmax.f32 %v1243, 0.0
        %v1308 = vmax.f32 %v1244, 0.0
        %v1309 = vmax.f32 %v1245, 0.0
        %v1310 = vmax.f32 %v1246, 0.0
        %v1311 = vmax.f32 %v1247, 0.0
        %v1312 = vsel %vm735, %v1248, 0.0
        %v1313 = vsel %vm736, %v1249, 0.0
        %v1314 = vsel %vm737, %v1250, 0.0
        %v1315 = vsel %vm738, %v1251, 0.0
        %v1316 = vsel %vm739, %v1252, 0.0
        %v1317 = vsel %vm740, %v1253, 0.0
        %v1318 = vsel %vm741, %v1254, 0.0
        %v1319 = vsel %vm742, %v1255, 0.0
        %v1320 = vsel %vm743, %v1256, 0.0
        %v1321 = vsel %vm744, %v1257, 0.0
        %v1322 = vsel %vm745, %v1258, 0.0
        %v1323 = vsel %vm746, %v1259, 0.0
        %v1324 = vsel %vm747, %v1260, 0.0
        %v1325 = vsel %vm748, %v1261, 0.0
        %v1326 = vsel %vm749, %v1262, 0.0
        %v1327 = vsel %vm750, %v1263, 0.0
        %v1328 = vsel %vm751, %v1264, 0.0
        %v1329 = vsel %vm752, %v1265, 0.0
        %v1330 = vsel %vm753, %v1266, 0.0
        %v1331 = vsel %vm754, %v1267, 0.0
        %v1332 = vsel %vm755, %v1268, 0.0
        %v1333 = vsel %vm756, %v1269, 0.0
        %v1334 = vsel %vm757, %v1270, 0.0
        %v1335 = vsel %vm758, %v1271, 0.0
        %v1336 = vsel %vm759, %v1272, 0.0
        %v1337 = vsel %vm760, %v1273, 0.0
        %v1338 = vsel %vm761, %v1274, 0.0
        %v1339 = vsel %vm762, %v1275, 0.0
        %v1340 = vsel %vm763, %v1276, 0.0
        %v1341 = vsel %vm764, %v1277, 0.0
        %v1342 = vsel %vm765, %v1278, 0.0
        %v1343 = vsel %vm766, %v1279, 0.0
        %v1344 = vsel %vm767, %v1280, 0.0
        %v1345 = vsel %vm768, %v1281, 0.0
        %v1346 = vsel %vm769, %v1282, 0.0
        %v1347 = vsel %vm770, %v1283, 0.0
        %v1348 = vsel %vm771, %v1284, 0.0
        %v1349 = vsel %vm772, %v1285, 0.0
        %v1350 = vsel %vm773, %v1286, 0.0
        %v1351 = vsel %vm774, %v1287, 0.0
        %v1352 = vsel %vm775, %v1288, 0.0
        %v1353 = vsel %vm776, %v1289, 0.0
        %v1354 = vsel %vm777, %v1290, 0.0
        %v1355 = vsel %vm778, %v1291, 0.0
        %v1356 = vsel %vm779, %v1292, 0.0
        %v1357 = vsel %vm780, %v1293, 0.0
        %v1358 = vsel %vm781, %v1294, 0.0
        %v1359 = vsel %vm782, %v1295, 0.0
        %v1360 = vsel %vm783, %v1296, 0.0
        %v1361 = vsel %vm784, %v1297, 0.0
        %v1362 = vsel %vm785, %v1298, 0.0
        %v1363 = vsel %vm786, %v1299, 0.0
        %v1364 = vsel %vm787, %v1300, 0.0
        %v1365 = vsel %vm788, %v1301, 0.0
        %v1366 = vsel %vm789, %v1302, 0.0
        %v1367 = vsel %vm790, %v1303, 0.0
        %v1368 = vsel %vm791, %v1304, 0.0
        %v1369 = vsel %vm792, %v1305, 0.0
        %v1370 = vsel %vm793, %v1306, 0.0
        %v1371 = vsel %vm794, %v1307, 0.0
        %v1372 = vsel %vm795, %v1308, 0.0
        %v1373 = vsel %vm796, %v1309, 0.0
        %v1374 = vsel %vm797, %v1310, 0.0
        %v1375 = vsel %vm798, %v1311, 0.0
        %v1408 = vunpack.c.l.b16 %v437
        %v1409 = vunpack.c.l.b16 %v438
        %v1410 = vunpack.c.l.b16 %v439
        %v1411 = vunpack.c.l.b16 %v440
        %v1412 = vunpack.c.l.b16 %v441
        %v1413 = vunpack.c.l.b16 %v442
        %v1414 = vunpack.c.l.b16 %v443
        %v1415 = vunpack.c.l.b16 %v444
        %v1416 = vunpack.c.l.b16 %v445
        %v1417 = vunpack.c.l.b16 %v446
        %v1418 = vunpack.c.l.b16 %v447
        %v1419 = vunpack.c.l.b16 %v448
        %v1420 = vunpack.c.l.b16 %v449
        %v1421 = vunpack.c.l.b16 %v450
        %v1422 = vunpack.c.l.b16 %v451
        %v1423 = vunpack.c.l.b16 %v452
        %v1424 = vunpack.c.l.b16 %v453
        %v1425 = vunpack.c.l.b16 %v454
        %v1426 = vunpack.c.l.b16 %v455
        %v1427 = vunpack.c.l.b16 %v456
        %v1428 = vunpack.c.l.b16 %v457
        %v1429 = vunpack.c.l.b16 %v458
        %v1430 = vunpack.c.l.b16 %v459
        %v1431 = vunpack.c.l.b16 %v460
        %v1432 = vunpack.c.l.b16 %v461
        %v1433 = vunpack.c.l.b16 %v462
        %v1434 = vunpack.c.l.b16 %v463
        %v1435 = vunpack.c.l.b16 %v464
        %v1436 = vunpack.c.l.b16 %v465
        %v1437 = vunpack.c.l.b16 %v466
        %v1438 = vunpack.c.l.b16 %v467
        %v1439 = vunpack.c.l.b16 %v468
        %v1440 = vpack.c.b16 %v1409, %v1408
        %v1441 = vpack.c.b16 %v1411, %v1410
        %v1442 = vpack.c.b16 %v1413, %v1412
        %v1443 = vpack.c.b16 %v1415, %v1414
        %v1444 = vpack.c.b16 %v1417, %v1416
        %v1445 = vpack.c.b16 %v1419, %v1418
        %v1446 = vpack.c.b16 %v1421, %v1420
        %v1447 = vpack.c.b16 %v1423, %v1422
        %v1448 = vpack.c.b16 %v1425, %v1424
        %v1449 = vpack.c.b16 %v1427, %v1426
        %v1450 = vpack.c.b16 %v1429, %v1428
        %v1451 = vpack.c.b16 %v1431, %v1430
        %v1452 = vpack.c.b16 %v1433, %v1432
        %v1453 = vpack.c.b16 %v1435, %v1434
        %v1454 = vpack.c.b16 %v1437, %v1436
        %v1455 = vpack.c.b16 %v1439, %v1438
        %v1504 = vunpack.c.l.b16 %v469
        %v1505 = vunpack.c.l.b16 %v470
        %v1506 = vunpack.c.l.b16 %v471
        %v1507 = vunpack.c.l.b16 %v472
        %v1508 = vunpack.c.l.b16 %v473
        %v1509 = vunpack.c.l.b16 %v474
        %v1510 = vunpack.c.l.b16 %v475
        %v1511 = vunpack.c.l.b16 %v476
        %v1512 = vunpack.c.l.b16 %v477
        %v1513 = vunpack.c.l.b16 %v478
        %v1514 = vunpack.c.l.b16 %v479
        %v1515 = vunpack.c.l.b16 %v480
        %v1516 = vunpack.c.l.b16 %v481
        %v1517 = vunpack.c.l.b16 %v482
        %v1518 = vunpack.c.l.b16 %v483
        %v1519 = vunpack.c.l.b16 %v484
        %v1520 = vunpack.c.l.b16 %v485
        %v1521 = vunpack.c.l.b16 %v486
        %v1522 = vunpack.c.l.b16 %v487
        %v1523 = vunpack.c.l.b16 %v488
        %v1524 = vunpack.c.l.b16 %v489
        %v1525 = vunpack.c.l.b16 %v490
        %v1526 = vunpack.c.l.b16 %v491
        %v1527 = vunpack.c.l.b16 %v492
        %v1528 = vunpack.c.l.b16 %v493
        %v1529 = vunpack.c.l.b16 %v494
        %v1530 = vunpack.c.l.b16 %v495
        %v1531 = vunpack.c.l.b16 %v496
        %v1532 = vunpack.c.l.b16 %v497
        %v1533 = vunpack.c.l.b16 %v498
        %v1534 = vunpack.c.l.b16 %v499
        %v1535 = vunpack.c.l.b16 %v500
        %v1536 = vpack.c.b16 %v1505, %v1504
        %v1537 = vpack.c.b16 %v1507, %v1506
        %v1538 = vpack.c.b16 %v1509, %v1508
        %v1539 = vpack.c.b16 %v1511, %v1510
        %v1540 = vpack.c.b16 %v1513, %v1512
        %v1541 = vpack.c.b16 %v1515, %v1514
        %v1542 = vpack.c.b16 %v1517, %v1516
        %v1543 = vpack.c.b16 %v1519, %v1518
        %v1544 = vpack.c.b16 %v1521, %v1520
        %v1545 = vpack.c.b16 %v1523, %v1522
        %v1546 = vpack.c.b16 %v1525, %v1524
        %v1547 = vpack.c.b16 %v1527, %v1526
        %v1548 = vpack.c.b16 %v1529, %v1528
        %v1549 = vpack.c.b16 %v1531, %v1530
        %v1550 = vpack.c.b16 %v1533, %v1532
        %v1551 = vpack.c.b16 %v1535, %v1534
        %1568 = vmatprep.subr.bf16.mxu0 0
        %1569 = vmatpush1.bf16.xpose.msra.mxu0 %v1536
        %1570 = vmatprep.subr.bf16.mxu0 0
        %1571 = vmatpush1.bf16.xpose.msra.mxu0 %v1537
        %1572 = vmatprep.subr.bf16.mxu0 0
        %1573 = vmatpush1.bf16.xpose.msra.mxu0 %v1538
        %1574 = vmatprep.subr.bf16.mxu0 0
        %1575 = vmatpush1.bf16.xpose.msra.mxu0 %v1539
        %1576 = vmatprep.subr.bf16.mxu0 0
        %1577 = vmatpush1.bf16.xpose.msra.mxu0 %v1540
        %1578 = vmatprep.subr.bf16.mxu0 0
        %1579 = vmatpush1.bf16.xpose.msra.mxu0 %v1541
        %1580 = vmatprep.subr.bf16.mxu0 0
        %1581 = vmatpush1.bf16.xpose.msra.mxu0 %v1542
        %1582 = vmatprep.subr.bf16.mxu0 0
        %1583 = vmatpush1.bf16.xpose.msra.mxu0 %v1543
        %1584 = vmatprep.subr.bf16.mxu0 0
        %1585 = vmatpush1.bf16.xpose.msra.mxu0 %v1544
        %1586 = vmatprep.subr.bf16.mxu0 0
        %1587 = vmatpush1.bf16.xpose.msra.mxu0 %v1545
        %1588 = vmatprep.subr.bf16.mxu0 0
        %1589 = vmatpush1.bf16.xpose.msra.mxu0 %v1546
        %1590 = vmatprep.subr.bf16.mxu0 0
        %1591 = vmatpush1.bf16.xpose.msra.mxu0 %v1547
        %1592 = vmatprep.subr.bf16.mxu0 0
        %1593 = vmatpush1.bf16.xpose.msra.mxu0 %v1548
        %1594 = vmatprep.subr.bf16.mxu0 0
        %1595 = vmatpush1.bf16.xpose.msra.mxu0 %v1549
        %1596 = vmatprep.subr.bf16.mxu0 0
        %1597 = vmatpush1.bf16.xpose.msra.mxu0 %v1550
        %1598 = vmatprep.subr.bf16.mxu0 0
        %1599 = vmatpush1.bf16.xpose.msra.mxu0 %v1551
        %1600 = vmatprep.mubr.bf16.mxu0 0
        %1601 = vmatmul.mubr.bf16.gmra.mrb[0].mxu0 %v1440
        %v1602 = vpop.f32.mrb[0].mxu0
        %v1603 = vadd.f32 0.0, %v1602
        %v1604 = vpop.f32.mrb[0].mxu0
        %v1605 = vadd.f32 0.0, %v1604
        %v1606 = vpop.f32.mrb[0].mxu0
        %v1607 = vadd.f32 0.0, %v1606
        %v1608 = vpop.f32.mrb[0].mxu0
        %v1609 = vadd.f32 0.0, %v1608
        %1610 = vmatprep.mubr.bf16.mxu0 0
        %1611 = vmatmul.mubr.bf16.gmra.mrb[0].mxu0 %v1441
        %v1612 = vpop.f32.mrb[0].mxu0
        %v1613 = vadd.f32 0.0, %v1612
        %v1614 = vpop.f32.mrb[0].mxu0
        %v1615 = vadd.f32 0.0, %v1614
        %v1616 = vpop.f32.mrb[0].mxu0
        %v1617 = vadd.f32 0.0, %v1616
        %v1618 = vpop.f32.mrb[0].mxu0
        %v1619 = vadd.f32 0.0, %v1618
        %1620 = vmatprep.mubr.bf16.mxu0 0
        %1621 = vmatmul.mubr.bf16.gmra.mrb[0].mxu0 %v1442
        %v1622 = vpop.f32.mrb[0].mxu0
        %v1623 = vadd.f32 0.0, %v1622
        %v1624 = vpop.f32.mrb[0].mxu0
        %v1625 = vadd.f32 0.0, %v1624
        %v1626 = vpop.f32.mrb[0].mxu0
        %v1627 = vadd.f32 0.0, %v1626
        %v1628 = vpop.f32.mrb[0].mxu0
        %v1629 = vadd.f32 0.0, %v1628
        %1630 = vmatprep.mubr.bf16.mxu0 0
        %1631 = vmatmul.mubr.bf16.gmra.mrb[0].mxu0 %v1443
        %v1632 = vpop.f32.mrb[0].mxu0
        %v1633 = vadd.f32 0.0, %v1632
        %v1634 = vpop.f32.mrb[0].mxu0
        %v1635 = vadd.f32 0.0, %v1634
        %v1636 = vpop.f32.mrb[0].mxu0
        %v1637 = vadd.f32 0.0, %v1636
        %v1638 = vpop.f32.mrb[0].mxu0
        %v1639 = vadd.f32 0.0, %v1638
        %1640 = vmatprep.mubr.bf16.mxu0 0
        %1641 = vmatmul.mubr.bf16.gmra.mrb[0].mxu0 %v1444
        %v1642 = vpop.f32.mrb[0].mxu0
        %v1643 = vadd.f32 0.0, %v1642
        %v1644 = vpop.f32.mrb[0].mxu0
        %v1645 = vadd.f32 0.0, %v1644
        %v1646 = vpop.f32.mrb[0].mxu0
        %v1647 = vadd.f32 0.0, %v1646
        %v1648 = vpop.f32.mrb[0].mxu0
        %v1649 = vadd.f32 0.0, %v1648
        %1650 = vmatprep.mubr.bf16.mxu0 0
        %1651 = vmatmul.mubr.bf16.gmra.mrb[0].mxu0 %v1445
        %v1652 = vpop.f32.mrb[0].mxu0
        %v1653 = vadd.f32 0.0, %v1652
        %v1654 = vpop.f32.mrb[0].mxu0
        %v1655 = vadd.f32 0.0, %v1654
        %v1656 = vpop.f32.mrb[0].mxu0
        %v1657 = vadd.f32 0.0, %v1656
        %v1658 = vpop.f32.mrb[0].mxu0
        %v1659 = vadd.f32 0.0, %v1658
        %1660 = vmatprep.mubr.bf16.mxu0 0
        %1661 = vmatmul.mubr.bf16.gmra.mrb[0].mxu0 %v1446
        %v1662 = vpop.f32.mrb[0].mxu0
        %v1663 = vadd.f32 0.0, %v1662
        %v1664 = vpop.f32.mrb[0].mxu0
        %v1665 = vadd.f32 0.0, %v1664
        %v1666 = vpop.f32.mrb[0].mxu0
        %v1667 = vadd.f32 0.0, %v1666
        %v1668 = vpop.f32.mrb[0].mxu0
        %v1669 = vadd.f32 0.0, %v1668
        %1670 = vmatprep.mubr.bf16.mxu0 0
        %1671 = vmatmul.mubr.bf16.gmra.mrb[0].mxu0 %v1447
        %v1672 = vpop.f32.mrb[0].mxu0
        %v1673 = vadd.f32 0.0, %v1672
        %v1674 = vpop.f32.mrb[0].mxu0
        %v1675 = vadd.f32 0.0, %v1674
        %v1676 = vpop.f32.mrb[0].mxu0
        %v1677 = vadd.f32 0.0, %v1676
        %v1678 = vpop.f32.mrb[0].mxu0
        %v1679 = vadd.f32 0.0, %v1678
        %1680 = vmatprep.mubr.bf16.mxu0 0
        %1681 = vmatmul.mubr.bf16.gmra.mrb[0].mxu0 %v1448
        %v1682 = vpop.f32.mrb[0].mxu0
        %v1683 = vadd.f32 0.0, %v1682
        %v1684 = vpop.f32.mrb[0].mxu0
        %v1685 = vadd.f32 0.0, %v1684
        %v1686 = vpop.f32.mrb[0].mxu0
        %v1687 = vadd.f32 0.0, %v1686
        %v1688 = vpop.f32.mrb[0].mxu0
        %v1689 = vadd.f32 0.0, %v1688
        %1690 = vmatprep.mubr.bf16.mxu0 0
        %1691 = vmatmul.mubr.bf16.gmra.mrb[0].mxu0 %v1449
        %v1692 = vpop.f32.mrb[0].mxu0
        %v1693 = vadd.f32 0.0, %v1692
        %v1694 = vpop.f32.mrb[0].mxu0
        %v1695 = vadd.f32 0.0, %v1694
        %v1696 = vpop.f32.mrb[0].mxu0
        %v1697 = vadd.f32 0.0, %v1696
        %v1698 = vpop.f32.mrb[0].mxu0
        %v1699 = vadd.f32 0.0, %v1698
        %1700 = vmatprep.mubr.bf16.mxu0 0
        %1701 = vmatmul.mubr.bf16.gmra.mrb[0].mxu0 %v1450
        %v1702 = vpop.f32.mrb[0].mxu0
        %v1703 = vadd.f32 0.0, %v1702
        %v1704 = vpop.f32.mrb[0].mxu0
        %v1705 = vadd.f32 0.0, %v1704
        %v1706 = vpop.f32.mrb[0].mxu0
        %v1707 = vadd.f32 0.0, %v1706
        %v1708 = vpop.f32.mrb[0].mxu0
        %v1709 = vadd.f32 0.0, %v1708
        %1710 = vmatprep.mubr.bf16.mxu0 0
        %1711 = vmatmul.mubr.bf16.gmra.mrb[0].mxu0 %v1451
        %v1712 = vpop.f32.mrb[0].mxu0
        %v1713 = vadd.f32 0.0, %v1712
        %v1714 = vpop.f32.mrb[0].mxu0
        %v1715 = vadd.f32 0.0, %v1714
        %v1716 = vpop.f32.mrb[0].mxu0
        %v1717 = vadd.f32 0.0, %v1716
        %v1718 = vpop.f32.mrb[0].mxu0
        %v1719 = vadd.f32 0.0, %v1718
        %1720 = vmatprep.mubr.bf16.mxu0 0
        %1721 = vmatmul.mubr.bf16.gmra.mrb[0].mxu0 %v1452
        %v1722 = vpop.f32.mrb[0].mxu0
        %v1723 = vadd.f32 0.0, %v1722
        %v1724 = vpop.f32.mrb[0].mxu0
        %v1725 = vadd.f32 0.0, %v1724
        %v1726 = vpop.f32.mrb[0].mxu0
        %v1727 = vadd.f32 0.0, %v1726
        %v1728 = vpop.f32.mrb[0].mxu0
        %v1729 = vadd.f32 0.0, %v1728
        %1730 = vmatprep.mubr.bf16.mxu0 0
        %1731 = vmatmul.mubr.bf16.gmra.mrb[0].mxu0 %v1453
        %v1732 = vpop.f32.mrb[0].mxu0
        %v1733 = vadd.f32 0.0, %v1732
        %v1734 = vpop.f32.mrb[0].mxu0
        %v1735 = vadd.f32 0.0, %v1734
        %v1736 = vpop.f32.mrb[0].mxu0
        %v1737 = vadd.f32 0.0, %v1736
        %v1738 = vpop.f32.mrb[0].mxu0
        %v1739 = vadd.f32 0.0, %v1738
        %1740 = vmatprep.mubr.bf16.mxu0 0
        %1741 = vmatmul.mubr.bf16.gmra.mrb[0].mxu0 %v1454
        %v1742 = vpop.f32.mrb[0].mxu0
        %v1743 = vadd.f32 0.0, %v1742
        %v1744 = vpop.f32.mrb[0].mxu0
        %v1745 = vadd.f32 0.0, %v1744
        %v1746 = vpop.f32.mrb[0].mxu0
        %v1747 = vadd.f32 0.0, %v1746
        %v1748 = vpop.f32.mrb[0].mxu0
        %v1749 = vadd.f32 0.0, %v1748
        %1750 = vmatprep.mubr.bf16.mxu0 0
        %1751 = vmatmul.mubr.bf16.gmra.mrb[0].mxu0 %v1455
        %v1752 = vpop.f32.mrb[0].mxu0
        %v1753 = vadd.f32 0.0, %v1752
        %v1754 = vpop.f32.mrb[0].mxu0
        %v1755 = vadd.f32 0.0, %v1754
        %v1756 = vpop.f32.mrb[0].mxu0
        %v1757 = vadd.f32 0.0, %v1756
        %v1758 = vpop.f32.mrb[0].mxu0
        %v1759 = vadd.f32 0.0, %v1758
        %1760 = vdwg.mxu0
        %v1761 = vsub.f32 %v1603, %v598
        %v1762 = vsub.f32 %v1605, %v598
        %v1763 = vsub.f32 %v1607, %v600
        %v1764 = vsub.f32 %v1609, %v600
        %v1765 = vsub.f32 %v1613, %v602
        %v1766 = vsub.f32 %v1615, %v602
        %v1767 = vsub.f32 %v1617, %v604
        %v1768 = vsub.f32 %v1619, %v604
        %v1769 = vsub.f32 %v1623, %v606
        %v1770 = vsub.f32 %v1625, %v606
        %v1771 = vsub.f32 %v1627, %v608
        %v1772 = vsub.f32 %v1629, %v608
        %v1773 = vsub.f32 %v1633, %v610
        %v1774 = vsub.f32 %v1635, %v610
        %v1775 = vsub.f32 %v1637, %v612
        %v1776 = vsub.f32 %v1639, %v612
        %v1777 = vsub.f32 %v1643, %v614
        %v1778 = vsub.f32 %v1645, %v614
        %v1779 = vsub.f32 %v1647, %v616
        %v1780 = vsub.f32 %v1649, %v616
        %v1781 = vsub.f32 %v1653, %v618
        %v1782 = vsub.f32 %v1655, %v618
        %v1783 = vsub.f32 %v1657, %v620
        %v1784 = vsub.f32 %v1659, %v620
        %v1785 = vsub.f32 %v1663, %v622
        %v1786 = vsub.f32 %v1665, %v622
        %v1787 = vsub.f32 %v1667, %v624
        %v1788 = vsub.f32 %v1669, %v624
        %v1789 = vsub.f32 %v1673, %v626
        %v1790 = vsub.f32 %v1675, %v626
        %v1791 = vsub.f32 %v1677, %v628
        %v1792 = vsub.f32 %v1679, %v628
        %v1793 = vsub.f32 %v1683, %v630
        %v1794 = vsub.f32 %v1685, %v630
        %v1795 = vsub.f32 %v1687, %v632
        %v1796 = vsub.f32 %v1689, %v632
        %v1797 = vsub.f32 %v1693, %v634
        %v1798 = vsub.f32 %v1695, %v634
        %v1799 = vsub.f32 %v1697, %v636
        %v1800 = vsub.f32 %v1699, %v636
        %v1801 = vsub.f32 %v1703, %v638
        %v1802 = vsub.f32 %v1705, %v638
        %v1803 = vsub.f32 %v1707, %v640
        %v1804 = vsub.f32 %v1709, %v640
        %v1805 = vsub.f32 %v1713, %v642
        %v1806 = vsub.f32 %v1715, %v642
        %v1807 = vsub.f32 %v1717, %v644
        %v1808 = vsub.f32 %v1719, %v644
        %v1809 = vsub.f32 %v1723, %v646
        %v1810 = vsub.f32 %v1725, %v646
        %v1811 = vsub.f32 %v1727, %v648
        %v1812 = vsub.f32 %v1729, %v648
        %v1813 = vsub.f32 %v1733, %v650
        %v1814 = vsub.f32 %v1735, %v650
        %v1815 = vsub.f32 %v1737, %v652
        %v1816 = vsub.f32 %v1739, %v652
        %v1817 = vsub.f32 %v1743, %v654
        %v1818 = vsub.f32 %v1745, %v654
        %v1819 = vsub.f32 %v1747, %v656
        %v1820 = vsub.f32 %v1749, %v656
        %v1821 = vsub.f32 %v1753, %v658
        %v1822 = vsub.f32 %v1755, %v658
        %v1823 = vsub.f32 %v1757, %v660
        %v1824 = vsub.f32 %v1759, %v660
        %v1825 = vmax.f32 %v1761, 0.0
        %v1826 = vmax.f32 %v1762, 0.0
        %v1827 = vmax.f32 %v1763, 0.0
        %v1828 = vmax.f32 %v1764, 0.0
        %v1829 = vmax.f32 %v1765, 0.0
        %v1830 = vmax.f32 %v1766, 0.0
        %v1831 = vmax.f32 %v1767, 0.0
        %v1832 = vmax.f32 %v1768, 0.0
        %v1833 = vmax.f32 %v1769, 0.0
        %v1834 = vmax.f32 %v1770, 0.0
        %v1835 = vmax.f32 %v1771, 0.0
        %v1836 = vmax.f32 %v1772, 0.0
        %v1837 = vmax.f32 %v1773, 0.0
        %v1838 = vmax.f32 %v1774, 0.0
        %v1839 = vmax.f32 %v1775, 0.0
        %v1840 = vmax.f32 %v1776, 0.0
        %v1841 = vmax.f32 %v1777, 0.0
        %v1842 = vmax.f32 %v1778, 0.0
        %v1843 = vmax.f32 %v1779, 0.0
        %v1844 = vmax.f32 %v1780, 0.0
        %v1845 = vmax.f32 %v1781, 0.0
        %v1846 = vmax.f32 %v1782, 0.0
        %v1847 = vmax.f32 %v1783, 0.0
        %v1848 = vmax.f32 %v1784, 0.0
        %v1849 = vmax.f32 %v1785, 0.0
        %v1850 = vmax.f32 %v1786, 0.0
        %v1851 = vmax.f32 %v1787, 0.0
        %v1852 = vmax.f32 %v1788, 0.0
        %v1853 = vmax.f32 %v1789, 0.0
        %v1854 = vmax.f32 %v1790, 0.0
        %v1855 = vmax.f32 %v1791, 0.0
        %v1856 = vmax.f32 %v1792, 0.0
        %v1857 = vmax.f32 %v1793, 0.0
        %v1858 = vmax.f32 %v1794, 0.0
        %v1859 = vmax.f32 %v1795, 0.0
        %v1860 = vmax.f32 %v1796, 0.0
        %v1861 = vmax.f32 %v1797, 0.0
        %v1862 = vmax.f32 %v1798, 0.0
        %v1863 = vmax.f32 %v1799, 0.0
        %v1864 = vmax.f32 %v1800, 0.0
        %v1865 = vmax.f32 %v1801, 0.0
        %v1866 = vmax.f32 %v1802, 0.0
        %v1867 = vmax.f32 %v1803, 0.0
        %v1868 = vmax.f32 %v1804, 0.0
        %v1869 = vmax.f32 %v1805, 0.0
        %v1870 = vmax.f32 %v1806, 0.0
        %v1871 = vmax.f32 %v1807, 0.0
        %v1872 = vmax.f32 %v1808, 0.0
        %v1873 = vmax.f32 %v1809, 0.0
        %v1874 = vmax.f32 %v1810, 0.0
        %v1875 = vmax.f32 %v1811, 0.0
        %v1876 = vmax.f32 %v1812, 0.0
        %v1877 = vmax.f32 %v1813, 0.0
        %v1878 = vmax.f32 %v1814, 0.0
        %v1879 = vmax.f32 %v1815, 0.0
        %v1880 = vmax.f32 %v1816, 0.0
        %v1881 = vmax.f32 %v1817, 0.0
        %v1882 = vmax.f32 %v1818, 0.0
        %v1883 = vmax.f32 %v1819, 0.0
        %v1884 = vmax.f32 %v1820, 0.0
        %v1885 = vmax.f32 %v1821, 0.0
        %v1886 = vmax.f32 %v1822, 0.0
        %v1887 = vmax.f32 %v1823, 0.0
        %v1888 = vmax.f32 %v1824, 0.0
        %v1889 = vsel %vm735, %v1825, 0.0
        %v1890 = vsel %vm736, %v1826, 0.0
        %v1891 = vsel %vm737, %v1827, 0.0
        %v1892 = vsel %vm738, %v1828, 0.0
        %v1893 = vsel %vm739, %v1829, 0.0
        %v1894 = vsel %vm740, %v1830, 0.0
        %v1895 = vsel %vm741, %v1831, 0.0
        %v1896 = vsel %vm742, %v1832, 0.0
        %v1897 = vsel %vm743, %v1833, 0.0
        %v1898 = vsel %vm744, %v1834, 0.0
        %v1899 = vsel %vm745, %v1835, 0.0
        %v1900 = vsel %vm746, %v1836, 0.0
        %v1901 = vsel %vm747, %v1837, 0.0
        %v1902 = vsel %vm748, %v1838, 0.0
        %v1903 = vsel %vm749, %v1839, 0.0
        %v1904 = vsel %vm750, %v1840, 0.0
        %v1905 = vsel %vm751, %v1841, 0.0
        %v1906 = vsel %vm752, %v1842, 0.0
        %v1907 = vsel %vm753, %v1843, 0.0
        %v1908 = vsel %vm754, %v1844, 0.0
        %v1909 = vsel %vm755, %v1845, 0.0
        %v1910 = vsel %vm756, %v1846, 0.0
        %v1911 = vsel %vm757, %v1847, 0.0
        %v1912 = vsel %vm758, %v1848, 0.0
        %v1913 = vsel %vm759, %v1849, 0.0
        %v1914 = vsel %vm760, %v1850, 0.0
        %v1915 = vsel %vm761, %v1851, 0.0
        %v1916 = vsel %vm762, %v1852, 0.0
        %v1917 = vsel %vm763, %v1853, 0.0
        %v1918 = vsel %vm764, %v1854, 0.0
        %v1919 = vsel %vm765, %v1855, 0.0
        %v1920 = vsel %vm766, %v1856, 0.0
        %v1921 = vsel %vm767, %v1857, 0.0
        %v1922 = vsel %vm768, %v1858, 0.0
        %v1923 = vsel %vm769, %v1859, 0.0
        %v1924 = vsel %vm770, %v1860, 0.0
        %v1925 = vsel %vm771, %v1861, 0.0
        %v1926 = vsel %vm772, %v1862, 0.0
        %v1927 = vsel %vm773, %v1863, 0.0
        %v1928 = vsel %vm774, %v1864, 0.0
        %v1929 = vsel %vm775, %v1865, 0.0
        %v1930 = vsel %vm776, %v1866, 0.0
        %v1931 = vsel %vm777, %v1867, 0.0
        %v1932 = vsel %vm778, %v1868, 0.0
        %v1933 = vsel %vm779, %v1869, 0.0
        %v1934 = vsel %vm780, %v1870, 0.0
        %v1935 = vsel %vm781, %v1871, 0.0
        %v1936 = vsel %vm782, %v1872, 0.0
        %v1937 = vsel %vm783, %v1873, 0.0
        %v1938 = vsel %vm784, %v1874, 0.0
        %v1939 = vsel %vm785, %v1875, 0.0
        %v1940 = vsel %vm786, %v1876, 0.0
        %v1941 = vsel %vm787, %v1877, 0.0
        %v1942 = vsel %vm788, %v1878, 0.0
        %v1943 = vsel %vm789, %v1879, 0.0
        %v1944 = vsel %vm790, %v1880, 0.0
        %v1945 = vsel %vm791, %v1881, 0.0
        %v1946 = vsel %vm792, %v1882, 0.0
        %v1947 = vsel %vm793, %v1883, 0.0
        %v1948 = vsel %vm794, %v1884, 0.0
        %v1949 = vsel %vm795, %v1885, 0.0
        %v1950 = vsel %vm796, %v1886, 0.0
        %v1951 = vsel %vm797, %v1887, 0.0
        %v1952 = vsel %vm798, %v1888, 0.0
        %v1953 = vld [vmem:[#allocation12] sm:$0x1]
        %v1954 = vadd.f32 %v1312, %v1313
        %1955 = vadd.xlane.f32.xlu0 %v1954
        %v1956 = vpop.xlane.xlu0 %1955
        %v1957 = vadd.f32 %v1314, %v1315
        %1958 = vadd.xlane.f32.xlu0 %v1957
        %v1959 = vpop.xlane.xlu0 %1958
        %v1960 = vadd.f32 %v1316, %v1317
        %1961 = vadd.xlane.f32.xlu0 %v1960
        %v1962 = vpop.xlane.xlu0 %1961
        %v1963 = vadd.f32 %v1318, %v1319
        %1964 = vadd.xlane.f32.xlu0 %v1963
        %v1965 = vpop.xlane.xlu0 %1964
        %v1966 = vadd.f32 %v1320, %v1321
        %1967 = vadd.xlane.f32.xlu0 %v1966
        %v1968 = vpop.xlane.xlu0 %1967
        %v1969 = vadd.f32 %v1322, %v1323
        %1970 = vadd.xlane.f32.xlu0 %v1969
        %v1971 = vpop.xlane.xlu0 %1970
        %v1972 = vadd.f32 %v1324, %v1325
        %1973 = vadd.xlane.f32.xlu0 %v1972
        %v1974 = vpop.xlane.xlu0 %1973
        %v1975 = vadd.f32 %v1326, %v1327
        %1976 = vadd.xlane.f32.xlu0 %v1975
        %v1977 = vpop.xlane.xlu0 %1976
        %v1978 = vadd.f32 %v1328, %v1329
        %1979 = vadd.xlane.f32.xlu0 %v1978
        %v1980 = vpop.xlane.xlu0 %1979
        %v1981 = vadd.f32 %v1330, %v1331
        %1982 = vadd.xlane.f32.xlu0 %v1981
        %v1983 = vpop.xlane.xlu0 %1982
        %v1984 = vadd.f32 %v1332, %v1333
        %1985 = vadd.xlane.f32.xlu0 %v1984
        %v1986 = vpop.xlane.xlu0 %1985
        %v1987 = vadd.f32 %v1334, %v1335
        %1988 = vadd.xlane.f32.xlu0 %v1987
        %v1989 = vpop.xlane.xlu0 %1988
        %v1990 = vadd.f32 %v1336, %v1337
        %1991 = vadd.xlane.f32.xlu0 %v1990
        %v1992 = vpop.xlane.xlu0 %1991
        %v1993 = vadd.f32 %v1338, %v1339
        %1994 = vadd.xlane.f32.xlu0 %v1993
        %v1995 = vpop.xlane.xlu0 %1994
        %v1996 = vadd.f32 %v1340, %v1341
        %1997 = vadd.xlane.f32.xlu0 %v1996
        %v1998 = vpop.xlane.xlu0 %1997
        %v1999 = vadd.f32 %v1342, %v1343
        %2000 = vadd.xlane.f32.xlu0 %v1999
        %v2001 = vpop.xlane.xlu0 %2000
        %v2002 = vadd.f32 %v1344, %v1345
        %2003 = vadd.xlane.f32.xlu0 %v2002
        %v2004 = vpop.xlane.xlu0 %2003
        %v2005 = vadd.f32 %v1346, %v1347
        %2006 = vadd.xlane.f32.xlu0 %v2005
        %v2007 = vpop.xlane.xlu0 %2006
        %v2008 = vadd.f32 %v1348, %v1349
        %2009 = vadd.xlane.f32.xlu0 %v2008
        %v2010 = vpop.xlane.xlu0 %2009
        %v2011 = vadd.f32 %v1350, %v1351
        %2012 = vadd.xlane.f32.xlu0 %v2011
        %v2013 = vpop.xlane.xlu0 %2012
        %v2014 = vadd.f32 %v1352, %v1353
        %2015 = vadd.xlane.f32.xlu0 %v2014
        %v2016 = vpop.xlane.xlu0 %2015
        %v2017 = vadd.f32 %v1354, %v1355
        %2018 = vadd.xlane.f32.xlu0 %v2017
        %v2019 = vpop.xlane.xlu0 %2018
        %v2020 = vadd.f32 %v1356, %v1357
        %2021 = vadd.xlane.f32.xlu0 %v2020
        %v2022 = vpop.xlane.xlu0 %2021
        %v2023 = vadd.f32 %v1358, %v1359
        %2024 = vadd.xlane.f32.xlu0 %v2023
        %v2025 = vpop.xlane.xlu0 %2024
        %v2026 = vadd.f32 %v1360, %v1361
        %2027 = vadd.xlane.f32.xlu0 %v2026
        %v2028 = vpop.xlane.xlu0 %2027
        %v2029 = vadd.f32 %v1362, %v1363
        %2030 = vadd.xlane.f32.xlu0 %v2029
        %v2031 = vpop.xlane.xlu0 %2030
        %v2032 = vadd.f32 %v1364, %v1365
        %2033 = vadd.xlane.f32.xlu0 %v2032
        %v2034 = vpop.xlane.xlu0 %2033
        %v2035 = vadd.f32 %v1366, %v1367
        %2036 = vadd.xlane.f32.xlu0 %v2035
        %v2037 = vpop.xlane.xlu0 %2036
        %v2038 = vadd.f32 %v1368, %v1369
        %2039 = vadd.xlane.f32.xlu0 %v2038
        %v2040 = vpop.xlane.xlu0 %2039
        %v2041 = vadd.f32 %v1370, %v1371
        %2042 = vadd.xlane.f32.xlu0 %v2041
        %v2043 = vpop.xlane.xlu0 %2042
        %v2044 = vadd.f32 %v1372, %v1373
        %2045 = vadd.xlane.f32.xlu0 %v2044
        %v2046 = vpop.xlane.xlu0 %2045
        %v2047 = vadd.f32 %v1374, %v1375
        %2048 = vadd.xlane.f32.xlu0 %v2047
        %v2049 = vpop.xlane.xlu0 %2048
        %v2050 = vadd.f32 %v1956, %v1959
        %v2051 = vadd.f32 %v2050, %v1962
        %v2052 = vadd.f32 %v2051, %v1965
        %v2053 = vadd.f32 %v2052, %v1968
        %v2054 = vadd.f32 %v2053, %v1971
        %v2055 = vadd.f32 %v2054, %v1974
        %v2056 = vadd.f32 %v2055, %v1977
        %v2057 = vadd.f32 %v2056, %v1980
        %v2058 = vadd.f32 %v2057, %v1983
        %v2059 = vadd.f32 %v2058, %v1986
        %v2060 = vadd.f32 %v2059, %v1989
        %v2061 = vadd.f32 %v2060, %v1992
        %v2062 = vadd.f32 %v2061, %v1995
        %v2063 = vadd.f32 %v2062, %v1998
        %v2064 = vadd.f32 %v2063, %v2001
        %v2065 = vadd.f32 %v2064, %v2004
        %v2066 = vadd.f32 %v2065, %v2007
        %v2067 = vadd.f32 %v2066, %v2010
        %v2068 = vadd.f32 %v2067, %v2013
        %v2069 = vadd.f32 %v2068, %v2016
        %v2070 = vadd.f32 %v2069, %v2019
        %v2071 = vadd.f32 %v2070, %v2022
        %v2072 = vadd.f32 %v2071, %v2025
        %v2073 = vadd.f32 %v2072, %v2028
        %v2074 = vadd.f32 %v2073, %v2031
        %v2075 = vadd.f32 %v2074, %v2034
        %v2076 = vadd.f32 %v2075, %v2037
        %v2077 = vadd.f32 %v2076, %v2040
        %v2078 = vadd.f32 %v2077, %v2043
        %v2079 = vadd.f32 %v2078, %v2046
        %v2080 = vadd.f32 %v2079, %v2049
        %v2081 = vrot.slane %v2080, 4
        %v2082 = vadd.f32 %v2080, %v2081
        %v2083 = vrot.slane %v2082, 2
        %v2084 = vadd.f32 %v2082, %v2083
        %v2085 = vrot.slane %v2084, 1
        %v2086 = vadd.f32 %v2084, %v2085
        %v2087 = vadd.f32 %v1953, %v2086
        %vm2088 = vcmask 0
        %2089 = vst.msk [vmem:[#allocation12] sm:$0x1] %vm2088, %v2087
        %v2090 = vld [vmem:[#allocation13] sm:$0x1]
        %v2091 = vadd.f32 %v1889, %v1890
        %2092 = vadd.xlane.f32.xlu0 %v2091
        %v2093 = vpop.xlane.xlu0 %2092
        %v2094 = vadd.f32 %v1891, %v1892
        %2095 = vadd.xlane.f32.xlu0 %v2094
        %v2096 = vpop.xlane.xlu0 %2095
        %v2097 = vadd.f32 %v1893, %v1894
        %2098 = vadd.xlane.f32.xlu0 %v2097
        %v2099 = vpop.xlane.xlu0 %2098
        %v2100 = vadd.f32 %v1895, %v1896
        %2101 = vadd.xlane.f32.xlu0 %v2100
        %v2102 = vpop.xlane.xlu0 %2101
        %v2103 = vadd.f32 %v1897, %v1898
        %2104 = vadd.xlane.f32.xlu0 %v2103
        %v2105 = vpop.xlane.xlu0 %2104
        %v2106 = vadd.f32 %v1899, %v1900
        %2107 = vadd.xlane.f32.xlu0 %v2106
        %v2108 = vpop.xlane.xlu0 %2107
        %v2109 = vadd.f32 %v1901, %v1902
        %2110 = vadd.xlane.f32.xlu0 %v2109
        %v2111 = vpop.xlane.xlu0 %2110
        %v2112 = vadd.f32 %v1903, %v1904
        %2113 = vadd.xlane.f32.xlu0 %v2112
        %v2114 = vpop.xlane.xlu0 %2113
        %v2115 = vadd.f32 %v1905, %v1906
        %2116 = vadd.xlane.f32.xlu0 %v2115
        %v2117 = vpop.xlane.xlu0 %2116
        %v2118 = vadd.f32 %v1907, %v1908
        %2119 = vadd.xlane.f32.xlu0 %v2118
        %v2120 = vpop.xlane.xlu0 %2119
        %v2121 = vadd.f32 %v1909, %v1910
        %2122 = vadd.xlane.f32.xlu0 %v2121
        %v2123 = vpop.xlane.xlu0 %2122
        %v2124 = vadd.f32 %v1911, %v1912
        %2125 = vadd.xlane.f32.xlu0 %v2124
        %v2126 = vpop.xlane.xlu0 %2125
        %v2127 = vadd.f32 %v1913, %v1914
        %2128 = vadd.xlane.f32.xlu0 %v2127
        %v2129 = vpop.xlane.xlu0 %2128
        %v2130 = vadd.f32 %v1915, %v1916
        %2131 = vadd.xlane.f32.xlu0 %v2130
        %v2132 = vpop.xlane.xlu0 %2131
        %v2133 = vadd.f32 %v1917, %v1918
        %2134 = vadd.xlane.f32.xlu0 %v2133
        %v2135 = vpop.xlane.xlu0 %2134
        %v2136 = vadd.f32 %v1919, %v1920
        %2137 = vadd.xlane.f32.xlu0 %v2136
        %v2138 = vpop.xlane.xlu0 %2137
        %v2139 = vadd.f32 %v1921, %v1922
        %2140 = vadd.xlane.f32.xlu0 %v2139
        %v2141 = vpop.xlane.xlu0 %2140
        %v2142 = vadd.f32 %v1923, %v1924
        %2143 = vadd.xlane.f32.xlu0 %v2142
        %v2144 = vpop.xlane.xlu0 %2143
        %v2145 = vadd.f32 %v1925, %v1926
        %2146 = vadd.xlane.f32.xlu0 %v2145
        %v2147 = vpop.xlane.xlu0 %2146
        %v2148 = vadd.f32 %v1927, %v1928
        %2149 = vadd.xlane.f32.xlu0 %v2148
        %v2150 = vpop.xlane.xlu0 %2149
        %v2151 = vadd.f32 %v1929, %v1930
        %2152 = vadd.xlane.f32.xlu0 %v2151
        %v2153 = vpop.xlane.xlu0 %2152
        %v2154 = vadd.f32 %v1931, %v1932
        %2155 = vadd.xlane.f32.xlu0 %v2154
        %v2156 = vpop.xlane.xlu0 %2155
        %v2157 = vadd.f32 %v1933, %v1934
        %2158 = vadd.xlane.f32.xlu0 %v2157
        %v2159 = vpop.xlane.xlu0 %2158
        %v2160 = vadd.f32 %v1935, %v1936
        %2161 = vadd.xlane.f32.xlu0 %v2160
        %v2162 = vpop.xlane.xlu0 %2161
        %v2163 = vadd.f32 %v1937, %v1938
        %2164 = vadd.xlane.f32.xlu0 %v2163
        %v2165 = vpop.xlane.xlu0 %2164
        %v2166 = vadd.f32 %v1939, %v1940
        %2167 = vadd.xlane.f32.xlu0 %v2166
        %v2168 = vpop.xlane.xlu0 %2167
        %v2169 = vadd.f32 %v1941, %v1942
        %2170 = vadd.xlane.f32.xlu0 %v2169
        %v2171 = vpop.xlane.xlu0 %2170
        %v2172 = vadd.f32 %v1943, %v1944
        %2173 = vadd.xlane.f32.xlu0 %v2172
        %v2174 = vpop.xlane.xlu0 %2173
        %v2175 = vadd.f32 %v1945, %v1946
        %2176 = vadd.xlane.f32.xlu0 %v2175
        %v2177 = vpop.xlane.xlu0 %2176
        %v2178 = vadd.f32 %v1947, %v1948
        %2179 = vadd.xlane.f32.xlu0 %v2178
        %v2180 = vpop.xlane.xlu0 %2179
        %v2181 = vadd.f32 %v1949, %v1950
        %2182 = vadd.xlane.f32.xlu0 %v2181
        %v2183 = vpop.xlane.xlu0 %2182
        %v2184 = vadd.f32 %v1951, %v1952
        %2185 = vadd.xlane.f32.xlu0 %v2184
        %v2186 = vpop.xlane.xlu0 %2185
        %v2187 = vadd.f32 %v2093, %v2096
        %v2188 = vadd.f32 %v2187, %v2099
        %v2189 = vadd.f32 %v2188, %v2102
        %v2190 = vadd.f32 %v2189, %v2105
        %v2191 = vadd.f32 %v2190, %v2108
        %v2192 = vadd.f32 %v2191, %v2111
        %v2193 = vadd.f32 %v2192, %v2114
        %v2194 = vadd.f32 %v2193, %v2117
        %v2195 = vadd.f32 %v2194, %v2120
        %v2196 = vadd.f32 %v2195, %v2123
        %v2197 = vadd.f32 %v2196, %v2126
        %v2198 = vadd.f32 %v2197, %v2129
        %v2199 = vadd.f32 %v2198, %v2132
        %v2200 = vadd.f32 %v2199, %v2135
        %v2201 = vadd.f32 %v2200, %v2138
        %v2202 = vadd.f32 %v2201, %v2141
        %v2203 = vadd.f32 %v2202, %v2144
        %v2204 = vadd.f32 %v2203, %v2147
        %v2205 = vadd.f32 %v2204, %v2150
        %v2206 = vadd.f32 %v2205, %v2153
        %v2207 = vadd.f32 %v2206, %v2156
        %v2208 = vadd.f32 %v2207, %v2159
        %v2209 = vadd.f32 %v2208, %v2162
        %v2210 = vadd.f32 %v2209, %v2165
        %v2211 = vadd.f32 %v2210, %v2168
        %v2212 = vadd.f32 %v2211, %v2171
        %v2213 = vadd.f32 %v2212, %v2174
        %v2214 = vadd.f32 %v2213, %v2177
        %v2215 = vadd.f32 %v2214, %v2180
        %v2216 = vadd.f32 %v2215, %v2183
        %v2217 = vadd.f32 %v2216, %v2186
        %v2218 = vrot.slane %v2217, 4
        %v2219 = vadd.f32 %v2217, %v2218
        %v2220 = vrot.slane %v2219, 2
        %v2221 = vadd.f32 %v2219, %v2220
        %v2222 = vrot.slane %v2221, 1
        %v2223 = vadd.f32 %v2221, %v2222
        %v2224 = vadd.f32 %v2090, %v2223
        %2225 = vst.msk [vmem:[#allocation13] sm:$0x1] %vm2088, %v2224
        // Predicated region
        $region57: #{tpu_custom_call.1} parent=35 // pred_check
          %p2226 = pneg %p157
        $region58: #{tpu_custom_call.1} parent=35 // pred_check_branch
          %2228 = sbr.rel (%p2226) target = $region60
        $region59: #{tpu_custom_call.1} parent=35 // pred_region
          %s2230 = ssub.s32 16, 16
          %2231 = vsyncadd [#allocation6], %s2230
          %s2233 = sshll.u32 [#allocation12], 4
          %s2234 = int_to_ptr.vmem [resolvable:$true] %s2233
          %2236 = dma.vmem_to_hbm [thread:$0]  %s2234, 16, %s4, [#allocation6]
        $region60: #{tpu_custom_call.1} parent=35 // pred_fallthru
          _
        // Predicated region
        $region61: #{tpu_custom_call.1} parent=35 // pred_check
          %p2237 = pneg %p178
        $region62: #{tpu_custom_call.1} parent=35 // pred_check_branch
          %2239 = sbr.rel (%p2237) target = $region64
        $region63: #{tpu_custom_call.1} parent=35 // pred_region
          %s2241 = ssub.s32 16, 16
          %2242 = vsyncadd [#allocation14], %s2241
          %s2244 = sshll.u32 [#allocation13], 4
          %s2245 = int_to_ptr.vmem [resolvable:$true] %s2244
          %2247 = dma.vmem_to_hbm [thread:$0]  %s2245, 16, %s5, [#allocation14]
        $region64: #{tpu_custom_call.1} parent=35 // pred_fallthru
          _
        // Predicated region
        $region65: #{tpu_custom_call.1} parent=35 // pred_check
          %p2248 = pneg %p157
        $region66: #{tpu_custom_call.1} parent=35 // pred_check_branch
          %2250 = sbr.rel (%p2248) target = $region68
        $region67: #{tpu_custom_call.1} parent=35 // pred_region
          %2251 = dma.done [#allocation6], 16
        $region68: #{tpu_custom_call.1} parent=35 // pred_fallthru
          _
        // Predicated region
        $region69: #{tpu_custom_call.1} parent=35 // pred_check
          %p2252 = pneg %p178
        $region70: #{tpu_custom_call.1} parent=35 // pred_check_branch
          %2254 = sbr.rel (%p2252) target = $region72
        $region71: #{tpu_custom_call.1} parent=35 // pred_region
          %2255 = dma.done [#allocation14], 16
        $region72: #{tpu_custom_call.1} parent=35 // pred_fallthru
          _
      $region36: #{tpu_custom_call.1} parent=5 // pred_fallthru
        _
      %p2256 = scmp.le.s32.totalorder 2, %s23
      // Predicated region
      $region73: #{tpu_custom_call.1} parent=5 // pred_check
        %p2257 = pneg %p2256
      $region74: #{tpu_custom_call.1} parent=5 // pred_check_branch
        %2259 = sbr.rel (%p2257) target = $region76
      $region75: #{tpu_custom_call.1} parent=5 // pred_region
        %s2260 = ssub.s32 %s23, 2
      $region76: #{tpu_custom_call.1} parent=5 // pred_fallthru
        _
    $region6: #{tpu_custom_call.1} parent=1 // loop_footer
      %s27 = sadd.s32 1, %s23
    $region7: #{tpu_custom_call.1} parent=1 // loop_footer_branch
      %22 = sbr.rel target = $region3
    $region8: #{tpu_custom_call.1} parent=1 // loop_exit
      _
    %2261 = vsyncpa [#allocation5], 1
    %s2262 = scalar_lea.sflag [#allocation5], 1
    %2263 = vsyncpa %s2262, 1
    %2264 = vsyncpa [#allocation8], 1
    %s2265 = scalar_lea.sflag [#allocation8], 1
    %2266 = vsyncpa %s2265, 1
    %2267 = vsyncpa [#allocation11], 1
    %s2268 = scalar_lea.sflag [#allocation11], 1
    %2269 = vsyncpa %s2268, 1
    %2270 = vsyncpa [#allocation6], 1
    %s2271 = scalar_lea.sflag [#allocation6], 1
    %2272 = vsyncpa %s2271, 1
    %2273 = vsyncpa [#allocation14], 1

</llo_original>
